<compile_context>
chip_gen: v5e
topology: v5e:2x2
jax: 0.10.0
libtpu: 0.0.40
codegen_flags: <defaults>
</compile_context>

<pallas_src>
import math
import numpy as np
import jax
import jax.numpy as jnp
from jax import lax
from jax.experimental import pallas as pl
from jax.experimental.pallas import tpu as pltpu

D_MODEL = 32          # input_size / d_model
NHEAD = 4
NUM_LAYERS = 3
DIM_FF = 256          # TransformerEncoderLayer dim_feedforward
HEAD_DIM = D_MODEL // NHEAD
N_OUT = 3             # fc output size
N_OUT_PAD = 128       # lane-dense fc output width (zeros beyond N_OUT, sliced in wrapper)
QKV_PAD = 128         # fused QKV output lanes (3*D = 96, zero-padded to 128)
LN_EPS = 1e-5
MATMUL_DTYPE = jnp.bfloat16   # MXU-native; accumulation stays f32


def _layernorm(y, g, b):
    # one-pass LN: the two cross-lane reductions (E[y], E[y*y]) are independent -> overlap
    mu = jnp.mean(y, axis=-1, keepdims=True)
    ms = jnp.mean(y * y, axis=-1, keepdims=True)
    return (y - mu) * lax.rsqrt(ms - mu * mu + LN_EPS) * g + b


def _layernorm_ref(y, g, b):
    # exact two-pass form for the pure-JAX reference (matches PyTorch)
    mu = jnp.mean(y, axis=-1, keepdims=True)
    var = jnp.mean((y - mu) ** 2, axis=-1, keepdims=True)
    return (y - mu) * lax.rsqrt(var + LN_EPS) * g + b


# ----------------------------------------------------------------------------- kernel
def ohlcv_kernel(x_ref, pe_ref, hm_ref, hmt_ref,
                 wqkv_ref, bqkv_ref, wo_ref, bo_ref,
                 w1_ref, b1_ref, w2_ref, b2_ref,
                 n1g_ref, n1b_ref, n2g_ref, n2b_ref,
                 fcw_ref, fcb_ref,
                 o_ref):
    B, S, D = x_ref.shape
    H = NHEAD

    # positional encoding along the seq axis (dim 1 of the original (B, S, D) input)
    x = x_ref[...] + pe_ref[...]                       # (B, S, D)
    x2 = x.reshape(B * S, D)                           # rows (b, s), kept in f32

    hm = hm_ref[...]                                   # (D, H) one-hot head mask, bf16
    hmt = hmt_ref[...]                                 # (H, D) one-hot, bf16

    for l in range(NUM_LAYERS):
        # ------------- multi-head self-attention (attended axis = B, batched over S) ----
        xb = x2.astype(MATMUL_DTYPE)
        # fused Q/K/V projection: single lane-dense (D, 128) matmul + one bias add.
        # (Wq pre-scaled by 1/sqrt(Dh) at pack time; lanes 96:128 are zero padding.)
        qkv = jnp.dot(xb, wqkv_ref[l], preferred_element_type=jnp.float32) + bqkv_ref[l]
        q3 = qkv[:, 0 * D:1 * D].reshape(B, S, D)
        k3 = qkv[:, 1 * D:2 * D].reshape(B, S, D)
        v3 = qkv[:, 2 * D:3 * D].reshape(B, S, D)

        if B == 2:
            # attended axis has length 2 -> closed-form softmax:
            #   p(key0) = sigmoid(score0 - score1), p(key1) = 1 - p(key0)
            # Only the score *difference* is needed, so one per-head reduce suffices.
            diff = q3 * (k3[0:1] - k3[1:2])                                   # (B, S, D)
            scd = jnp.dot(diff.reshape(B * S, D).astype(MATMUL_DTYPE), hm,
                          preferred_element_type=jnp.float32)                 # (B*S, H)
            p0 = pl.reciprocal(1.0 + jnp.exp(-scd), approx=True)              # sigmoid (EUP)
            # broadcast head probabilities back to feature width (one-hot, bf16)
            p0d = jnp.dot(p0.astype(MATMUL_DTYPE), hmt,
                          preferred_element_type=jnp.float32).reshape(B, S, D)
            o = v3[1:2] + p0d * (v3[0:1] - v3[1:2])                           # (B, S, D)
        else:
            # general attended length: outer-product scores + full softmax (bf16 matmuls).
            # TODO(synk): for large B restructure as per-(s,h) MXU matmuls instead of the
            # O(B^2) prod intermediate (VMEM pressure on v5e/v7x).
            prod = q3[:, None, :, :] * k3[None, :, :, :]                      # (B, B, S, D)
            sc = jnp.dot(prod.reshape(B * B * S, D).astype(MATMUL_DTYPE), hm,
                         preferred_element_type=jnp.float32).reshape(B, B, S, H)
            m = jnp.max(sc, axis=1, keepdims=True)
            e = jnp.exp(sc - m)
            ssum = jnp.sum(e, axis=1, keepdims=True)
            p4 = e * pl.reciprocal(ssum, approx=True)                         # (B, B, S, H)
            pb = jnp.dot(p4.reshape(B * B * S, H).astype(MATMUL_DTYPE), hmt,
                         preferred_element_type=jnp.float32).reshape(B, B, S, D)
            o = jnp.sum(pb * v3[None, :, :, :], axis=1)                       # (B, S, D)

        # fused out-projection (heads already concatenated in natural (h, dh) order)
        attn = jnp.dot(o.reshape(B * S, D).astype(MATMUL_DTYPE), wo_ref[l],
                       preferred_element_type=jnp.float32) + bo_ref[l]

        # ------------- post-LN residual blocks (norm_first=False); dropout = identity ----
        y = _layernorm(x2 + attn, n1g_ref[l], n1b_ref[l])
        ff = jnp.maximum(jnp.dot(y.astype(MATMUL_DTYPE), w1_ref[l],
                                 preferred_element_type=jnp.float32) + b1_ref[l], 0.0)
        ff2 = jnp.dot(ff.astype(MATMUL_DTYPE), w2_ref[l],
                      preferred_element_type=jnp.float32) + b2_ref[l]
        x2 = _layernorm(y + ff2, n2g_ref[l], n2b_ref[l])

    # mean over the seq axis (original dim 1), then lane-dense fc (padded to 128 lanes)
    pooled = jnp.mean(x2.reshape(B, S, D), axis=1)                            # (B, D)
    o_ref[...] = (jnp.dot(pooled.astype(MATMUL_DTYPE), fcw_ref[...],
                          preferred_element_type=jnp.float32) + fcb_ref[...])


# ----------------------------------------------------------------------------- packing
def make_pe(seq_len, d_model):
    # identical to PositionalEncoding.__init__ (first seq_len rows); assumes even d_model
    position = np.arange(seq_len, dtype=np.float32)[:, None]
    div_term = np.exp(np.arange(0, d_model, 2, dtype=np.float32)
                      * (-math.log(10000.0) / d_model))
    pe = np.zeros((seq_len, d_model), dtype=np.float32)
    pe[:, 0::2] = np.sin(position * div_term[: d_model // 2 + 1])
    pe[:, 1::2] = np.cos(position * div_term[: d_model // 2])
    return jnp.asarray(pe)


def init_params(key):
    # deterministic synthetic parameters (shapes match the PyTorch module)
    L, D, F = NUM_LAYERS, D_MODEL, DIM_FF
    ks = jax.random.split(key, 6)

    def nrm(k, shape, scale):
        return (scale * jax.random.normal(k, shape)).astype(jnp.float32)

    return {
        'in_w': nrm(ks[0], (L, 3 * D, D), 1.0 / math.sqrt(D)),   # MHA in_proj_weight
        'in_b': nrm(ks[1], (L, 3 * D), 0.02),                    # MHA in_proj_bias
        'out_w': nrm(ks[2], (L, D, D), 1.0 / math.sqrt(D)),      # MHA out_proj
        'out_b': jnp.zeros((L, D), jnp.float32),
        'l1_w': nrm(ks[3], (L, F, D), 1.0 / math.sqrt(D)),       # linear1
        'l1_b': jnp.zeros((L, F), jnp.float32),
        'l2_w': nrm(ks[4], (L, D, F), 1.0 / math.sqrt(F)),       # linear2
        'l2_b': jnp.zeros((L, D), jnp.float32),
        'n1_g': jnp.ones((L, D), jnp.float32), 'n1_b': jnp.zeros((L, D), jnp.float32),
        'n2_g': jnp.ones((L, D), jnp.float32), 'n2_b': jnp.zeros((L, D), jnp.float32),
        'fc_w': nrm(ks[5], (N_OUT, D), 1.0 / math.sqrt(D)),      # fc
        'fc_b': jnp.zeros((N_OUT,), jnp.float32),
    }


def pack_params(P, dtype=MATMUL_DTYPE):
    """One-time (model-load) repacking: QKV fusion + lane padding, transposes, scale folding,
    bf16 cast, fc padding.  Nothing here runs on the per-forward path."""
    L, D, H, Dh = NUM_LAYERS, D_MODEL, NHEAD, HEAD_DIM
    scale = 1.0 / math.sqrt(Dh)

    in_w, in_b = P['in_w'], P['in_b']                         # (L, 3D, D), (L, 3D)
    w_q, w_k, w_v = in_w[:, :D], in_w[:, D:2 * D], in_w[:, 2 * D:]
    b_q, b_k, b_v = in_b[:, :D], in_b[:, D:2 * D], in_b[:, 2 * D:]

    # fused x @ [Wq^T*s | Wk^T | Wv^T | 0], zero-padded to 128 lanes (lane-dense MXU output)
    wqkv = jnp.concatenate(
        [w_q.transpose(0, 2, 1) * scale,
         w_k.transpose(0, 2, 1),
         w_v.transpose(0, 2, 1),
         jnp.zeros((L, D, QKV_PAD - 3 * D), jnp.float32)], axis=-1)           # (L, D, 128)
    bqkv = jnp.concatenate(
        [b_q * scale, b_k, b_v,
         jnp.zeros((L, QKV_PAD - 3 * D), jnp.float32)], axis=-1)              # (L, 128)

    # one-hot head membership mask: hm[d, h] = 1 iff feature d belongs to head h (bf16)
    head_id = jnp.arange(D) // Dh
    hm = (head_id[:, None] == jnp.arange(H)[None, :]).astype(dtype)           # (D, H)

    # lane-dense fc: pad weight/bias to 128 output lanes (zeros beyond N_OUT)
    fcw = jnp.zeros((D, N_OUT_PAD), jnp.float32).at[:, :N_OUT].set(P['fc_w'].T)
    fcb = jnp.zeros((1, N_OUT_PAD), jnp.float32).at[0, :N_OUT].set(P['fc_b'])

    return {
        'wqkv': wqkv.astype(dtype),                                           # (L, D, 128)
        'bqkv': bqkv[:, None, :].astype(jnp.float32),                         # (L, 1, 128)
        'hm': hm,
        'hmt': jnp.transpose(hm),                                             # (H, D)
        'wo': P['out_w'].transpose(0, 2, 1).astype(dtype),                    # (L, D, D)
        'bo': P['out_b'][:, None, :].astype(jnp.float32),                     # (L, 1, D)
        'w1': P['l1_w'].transpose(0, 2, 1).astype(dtype),                     # (L, D, F)
        'b1': P['l1_b'][:, None, :].astype(jnp.float32),                      # (L, 1, F)
        'w2': P['l2_w'].transpose(0, 2, 1).astype(dtype),                     # (L, F, D)
        'b2': P['l2_b'][:, None, :].astype(jnp.float32),                      # (L, 1, D)
        'n1g': P['n1_g'][:, None, :], 'n1b': P['n1_b'][:, None, :],
        'n2g': P['n2_g'][:, None, :], 'n2b': P['n2_b'][:, None, :],
        'fcw': fcw.astype(dtype),                                             # (D, 128)
        'fcb': fcb,                                                           # (1, 128)
    }


def ohlcv_transformer_pallas(x, pk, pe):
    """Forward pass: no per-call reshaping/transposing; everything already packed."""
    B = x.shape[0]
    args = (x.astype(jnp.float32), pe, pk['hm'], pk['hmt'],
            pk['wqkv'], pk['bqkv'], pk['wo'], pk['bo'],
            pk['w1'], pk['b1'], pk['w2'], pk['b2'],
            pk['n1g'], pk['n1b'], pk['n2g'], pk['n2b'],
            pk['fcw'], pk['fcb'])
    out = pl.pallas_call(
        ohlcv_kernel,
        out_shape=jax.ShapeDtypeStruct((B, N_OUT_PAD), jnp.float32),
        in_specs=[pl.BlockSpec(memory_space=pltpu.MemorySpace.VMEM)] * len(args),
        out_specs=pl.BlockSpec(memory_space=pltpu.MemorySpace.VMEM),
        # resident data < 300 KB; right-sized well under v5e's 16 MiB scoped default
        compiler_params=pltpu.CompilerParams(vmem_limit_bytes=4 * 1024 * 1024),
    )(*args)
    return out[:, :N_OUT]   # drop zero-padded lanes (kernel-side store stays lane-dense)


# ------------------------------------------------------------------ pure-JAX reference
def ref_forward(x, P, pe):
    """Mirrors the PyTorch forward exactly (batch_first=False, eval mode, f32 highest)."""
    D, Dh = D_MODEL, HEAD_DIM
    h = x + pe[None, :, :]                                 # pe along dim 1
    for l in range(NUM_LAYERS):
        L0, L1 = h.shape[0], h.shape[1]
        qkv = jnp.einsum('abd,ed->abe', h, P['in_w'][l], precision='highest') + P['in_b'][l]
        q, k, v = qkv[..., :D], qkv[..., D:2 * D], qkv[..., 2 * D:]
        q = q.reshape(L0, L1, NHEAD, Dh) / math.sqrt(Dh)
        k = k.reshape(L0, L1, NHEAD, Dh)
        v = v.reshape(L0, L1, NHEAD, Dh)
        att = jnp.einsum('inhd,jnhd->nhij', q, k, precision='highest')   # attend over dim 0
        att = jax.nn.softmax(att, axis=-1)
        o = jnp.einsum('nhij,jnhd->inhd', att, v, precision='highest').reshape(L0, L1, D)
        o = jnp.einsum('abd,ed->abe', o, P['out_w'][l], precision='highest') + P['out_b'][l]
        h = _layernorm_ref(h + o, P['n1_g'][l], P['n1_b'][l])
        ff = jax.nn.relu(jnp.einsum('abd,fd->abf', h, P['l1_w'][l], precision='highest')
                         + P['l1_b'][l])
        ff = jnp.einsum('abf,df->abd', ff, P['l2_w'][l], precision='highest') + P['l2_b'][l]
        h = _layernorm_ref(h + ff, P['n2_g'][l], P['n2_b'][l])
    pooled = jnp.mean(h, axis=1)
    return jnp.dot(pooled, P['fc_w'].T, precision='highest') + P['fc_b']


if __name__ == "__main__":
    key = jax.random.PRNGKey(0)
    kx, kp = jax.random.split(key)
    B, S, D = 2, 8, D_MODEL                               # batch=2, seq=8, input_size=32
    x = jax.random.normal(kx, (B, S, D), dtype=jnp.float32)
    P = init_params(kp)
    pe = make_pe(S, D)
    packed = pack_params(P)                               # hoisted, one-time packing

    out = ohlcv_transformer_pallas(x, packed, pe)
    out = jax.block_until_ready(out)

    ref = ref_forward(x, P, pe)
    assert out.shape == (B, N_OUT)
    # tolerance accounts for bf16 MXU matmuls (f32 accumulate) incl. the bf16 score path
    # and approx-reciprocal sigmoid vs the f32-'highest' reference; any semantic error
    # (wrong attention axis / missing LN / residual) is >10x larger.
    if not np.allclose(np.asarray(out), np.asarray(ref), atol=4e-2, rtol=4e-2):
        raise AssertionError(f"mismatch:\n{np.asarray(out)}\nvs\n{np.asarray(ref)}")
    print("KERNEL_OK")
</pallas_src>

<mosaic_0001>
module attributes {stable_mosaic.version = 11 : i64} {
  func.func @ohlcv_kernel(%arg0: memref<2x8x32xf32, #tpu.memory_space<vmem>>, %arg1: memref<8x32xf32, #tpu.memory_space<vmem>>, %arg2: memref<32x4xbf16, #tpu.memory_space<vmem>>, %arg3: memref<4x32xbf16, #tpu.memory_space<vmem>>, %arg4: memref<3x32x128xbf16, #tpu.memory_space<vmem>>, %arg5: memref<3x1x128xf32, #tpu.memory_space<vmem>>, %arg6: memref<3x32x32xbf16, #tpu.memory_space<vmem>>, %arg7: memref<3x1x32xf32, #tpu.memory_space<vmem>>, %arg8: memref<3x32x256xbf16, #tpu.memory_space<vmem>>, %arg9: memref<3x1x256xf32, #tpu.memory_space<vmem>>, %arg10: memref<3x256x32xbf16, #tpu.memory_space<vmem>>, %arg11: memref<3x1x32xf32, #tpu.memory_space<vmem>>, %arg12: memref<3x1x32xf32, #tpu.memory_space<vmem>>, %arg13: memref<3x1x32xf32, #tpu.memory_space<vmem>>, %arg14: memref<3x1x32xf32, #tpu.memory_space<vmem>>, %arg15: memref<3x1x32xf32, #tpu.memory_space<vmem>>, %arg16: memref<32x128xbf16, #tpu.memory_space<vmem>>, %arg17: memref<1x128xf32, #tpu.memory_space<vmem>>, %arg18: memref<2x128xf32, #tpu.memory_space<vmem>>) attributes {dimension_semantics = [], scalar_prefetch = 0 : i64, scratch_operands = 0 : i64, tpu.core_type = #tpu.core_type<tc>} {
    %c0 = arith.constant 0 : index
    %c0_0 = arith.constant 0 : index
    %c0_1 = arith.constant 0 : index
    %0 = vector.load %arg0[%c0, %c0_0, %c0_1] : memref<2x8x32xf32, #tpu.memory_space<vmem>>, vector<2x8x32xf32>
    %c0_2 = arith.constant 0 : index
    %c0_3 = arith.constant 0 : index
    %1 = vector.load %arg1[%c0_2, %c0_3] : memref<8x32xf32, #tpu.memory_space<vmem>>, vector<8x32xf32>
    %2 = vector.shape_cast %1 : vector<8x32xf32> to vector<1x8x32xf32>
    %3 = vector.broadcast %2 : vector<1x8x32xf32> to vector<2x8x32xf32>
    %4 = arith.addf %0, %3 : vector<2x8x32xf32>
    %5 = vector.shape_cast %4 : vector<2x8x32xf32> to vector<16x32xf32>
    %c0_4 = arith.constant 0 : index
    %c0_5 = arith.constant 0 : index
    %6 = vector.load %arg2[%c0_4, %c0_5] : memref<32x4xbf16, #tpu.memory_space<vmem>>, vector<32x4xbf16>
    %c0_6 = arith.constant 0 : index
    %c0_7 = arith.constant 0 : index
    %7 = vector.load %arg3[%c0_6, %c0_7] : memref<4x32xbf16, #tpu.memory_space<vmem>>, vector<4x32xbf16>
    %8 = arith.truncf %5 : vector<16x32xf32> to vector<16x32xbf16>
    %c0_8 = arith.constant 0 : index
    %c0_9 = arith.constant 0 : index
    %c0_10 = arith.constant 0 : index
    %9 = vector.load %arg4[%c0_8, %c0_9, %c0_10] : memref<3x32x128xbf16, #tpu.memory_space<vmem>>, vector<1x32x128xbf16>
    %10 = vector.shape_cast %9 : vector<1x32x128xbf16> to vector<32x128xbf16>
    %cst = arith.constant dense<0.000000e+00> : vector<16x128xf32>
    %11 = tpu.matmul %8, %10, %cst {dimension_numbers = #tpu.dot_dimension_numbers<[1], [0], [0], [1], [0, 0, 1, 1], [], []>} : vector<16x32xbf16>, vector<32x128xbf16>, vector<16x128xf32> -> vector<16x128xf32>
    %c0_11 = arith.constant 0 : index
    %c0_12 = arith.constant 0 : index
    %c0_13 = arith.constant 0 : index
    %12 = vector.load %arg5[%c0_11, %c0_12, %c0_13] : memref<3x1x128xf32, #tpu.memory_space<vmem>>, vector<1x1x128xf32>
    %13 = vector.shape_cast %12 : vector<1x1x128xf32> to vector<1x128xf32>
    %14 = vector.broadcast %13 : vector<1x128xf32> to vector<16x128xf32>
    %15 = arith.addf %11, %14 : vector<16x128xf32>
    %16 = vector.extract_strided_slice %15 {offsets = [0, 0], sizes = [16, 32], strides = [1, 1]} : vector<16x128xf32> to vector<16x32xf32>
    %17 = vector.shape_cast %16 : vector<16x32xf32> to vector<2x8x32xf32>
    %18 = vector.extract_strided_slice %15 {offsets = [0, 32], sizes = [16, 32], strides = [1, 1]} : vector<16x128xf32> to vector<16x32xf32>
    %19 = vector.shape_cast %18 : vector<16x32xf32> to vector<2x8x32xf32>
    %20 = vector.extract_strided_slice %15 {offsets = [0, 64], sizes = [16, 32], strides = [1, 1]} : vector<16x128xf32> to vector<16x32xf32>
    %21 = vector.shape_cast %20 : vector<16x32xf32> to vector<2x8x32xf32>
    %22 = vector.extract_strided_slice %19 {offsets = [0, 0, 0], sizes = [1, 8, 32], strides = [1, 1, 1]} : vector<2x8x32xf32> to vector<1x8x32xf32>
    %23 = vector.extract_strided_slice %19 {offsets = [1, 0, 0], sizes = [1, 8, 32], strides = [1, 1, 1]} : vector<2x8x32xf32> to vector<1x8x32xf32>
    %24 = arith.subf %22, %23 : vector<1x8x32xf32>
    %25 = vector.broadcast %24 : vector<1x8x32xf32> to vector<2x8x32xf32>
    %26 = arith.mulf %17, %25 : vector<2x8x32xf32>
    %27 = vector.shape_cast %26 : vector<2x8x32xf32> to vector<16x32xf32>
    %28 = arith.truncf %27 : vector<16x32xf32> to vector<16x32xbf16>
    %cst_14 = arith.constant dense<0.000000e+00> : vector<16x4xf32>
    %29 = tpu.matmul %28, %6, %cst_14 {dimension_numbers = #tpu.dot_dimension_numbers<[1], [0], [0], [1], [0, 0, 1, 1], [], []>} : vector<16x32xbf16>, vector<32x4xbf16>, vector<16x4xf32> -> vector<16x4xf32>
    %cst_15 = arith.constant 0.000000e+00 : f32
    %30 = vector.broadcast %cst_15 : f32 to vector<16x4xf32>
    %31 = arith.subf %30, %29 : vector<16x4xf32>
    %32 = math.exp %31 : vector<16x4xf32>
    %cst_16 = arith.constant 1.000000e+00 : f32
    %33 = vector.broadcast %cst_16 : f32 to vector<16x4xf32>
    %34 = arith.addf %33, %32 : vector<16x4xf32>
    %35 = tpu.reciprocal %34 {approx = true} : vector<16x4xf32> -> vector<16x4xf32>
    %36 = arith.truncf %35 : vector<16x4xf32> to vector<16x4xbf16>
    %cst_17 = arith.constant dense<0.000000e+00> : vector<16x32xf32>
    %37 = tpu.matmul %36, %7, %cst_17 {dimension_numbers = #tpu.dot_dimension_numbers<[1], [0], [0], [1], [0, 0, 1, 1], [], []>} : vector<16x4xbf16>, vector<4x32xbf16>, vector<16x32xf32> -> vector<16x32xf32>
    %38 = vector.shape_cast %37 : vector<16x32xf32> to vector<2x8x32xf32>
    %39 = vector.extract_strided_slice %21 {offsets = [1, 0, 0], sizes = [1, 8, 32], strides = [1, 1, 1]} : vector<2x8x32xf32> to vector<1x8x32xf32>
    %40 = vector.extract_strided_slice %21 {offsets = [0, 0, 0], sizes = [1, 8, 32], strides = [1, 1, 1]} : vector<2x8x32xf32> to vector<1x8x32xf32>
    %41 = vector.extract_strided_slice %21 {offsets = [1, 0, 0], sizes = [1, 8, 32], strides = [1, 1, 1]} : vector<2x8x32xf32> to vector<1x8x32xf32>
    %42 = arith.subf %40, %41 : vector<1x8x32xf32>
    %43 = vector.broadcast %42 : vector<1x8x32xf32> to vector<2x8x32xf32>
    %44 = arith.mulf %38, %43 : vector<2x8x32xf32>
    %45 = vector.broadcast %39 : vector<1x8x32xf32> to vector<2x8x32xf32>
    %46 = arith.addf %45, %44 : vector<2x8x32xf32>
    %47 = vector.shape_cast %46 : vector<2x8x32xf32> to vector<16x32xf32>
    %48 = arith.truncf %47 : vector<16x32xf32> to vector<16x32xbf16>
    %c0_18 = arith.constant 0 : index
    %c0_19 = arith.constant 0 : index
    %c0_20 = arith.constant 0 : index
    %49 = vector.load %arg6[%c0_18, %c0_19, %c0_20] : memref<3x32x32xbf16, #tpu.memory_space<vmem>>, vector<1x32x32xbf16>
    %50 = vector.shape_cast %49 : vector<1x32x32xbf16> to vector<32x32xbf16>
    %cst_21 = arith.constant dense<0.000000e+00> : vector<16x32xf32>
    %51 = tpu.matmul %48, %50, %cst_21 {dimension_numbers = #tpu.dot_dimension_numbers<[1], [0], [0], [1], [0, 0, 1, 1], [], []>} : vector<16x32xbf16>, vector<32x32xbf16>, vector<16x32xf32> -> vector<16x32xf32>
    %c0_22 = arith.constant 0 : index
    %c0_23 = arith.constant 0 : index
    %c0_24 = arith.constant 0 : index
    %52 = vector.load %arg7[%c0_22, %c0_23, %c0_24] : memref<3x1x32xf32, #tpu.memory_space<vmem>>, vector<1x1x32xf32>
    %53 = vector.shape_cast %52 : vector<1x1x32xf32> to vector<1x32xf32>
    %54 = vector.broadcast %53 : vector<1x32xf32> to vector<16x32xf32>
    %55 = arith.addf %51, %54 : vector<16x32xf32>
    %56 = arith.addf %5, %55 : vector<16x32xf32>
    %c0_25 = arith.constant 0 : index
    %c0_26 = arith.constant 0 : index
    %c0_27 = arith.constant 0 : index
    %57 = vector.load %arg12[%c0_25, %c0_26, %c0_27] : memref<3x1x32xf32, #tpu.memory_space<vmem>>, vector<1x1x32xf32>
    %58 = vector.shape_cast %57 : vector<1x1x32xf32> to vector<1x32xf32>
    %c0_28 = arith.constant 0 : index
    %c0_29 = arith.constant 0 : index
    %c0_30 = arith.constant 0 : index
    %59 = vector.load %arg13[%c0_28, %c0_29, %c0_30] : memref<3x1x32xf32, #tpu.memory_space<vmem>>, vector<1x1x32xf32>
    %60 = vector.shape_cast %59 : vector<1x1x32xf32> to vector<1x32xf32>
    %cst_31 = arith.constant dense<0.000000e+00> : vector<16xf32>
    %61 = vector.multi_reduction <add>, %56, %cst_31 [1] : vector<16x32xf32> to vector<16xf32>
    %62 = vector.shape_cast %61 : vector<16xf32> to vector<16x1xf32>
    %cst_32 = arith.constant 3.200000e+01 : f32
    %63 = vector.broadcast %cst_32 : f32 to vector<16x1xf32>
    %64 = arith.divf %62, %63 : vector<16x1xf32>
    %65 = arith.mulf %56, %56 : vector<16x32xf32>
    %cst_33 = arith.constant dense<0.000000e+00> : vector<16xf32>
    %66 = vector.multi_reduction <add>, %65, %cst_33 [1] : vector<16x32xf32> to vector<16xf32>
    %67 = vector.shape_cast %66 : vector<16xf32> to vector<16x1xf32>
    %cst_34 = arith.constant 3.200000e+01 : f32
    %68 = vector.broadcast %cst_34 : f32 to vector<16x1xf32>
    %69 = arith.divf %67, %68 : vector<16x1xf32>
    %70 = vector.broadcast %64 : vector<16x1xf32> to vector<16x32xf32>
    %71 = arith.subf %56, %70 : vector<16x32xf32>
    %72 = arith.mulf %64, %64 : vector<16x1xf32>
    %73 = arith.subf %69, %72 : vector<16x1xf32>
    %cst_35 = arith.constant 9.99999974E-6 : f32
    %74 = vector.broadcast %cst_35 : f32 to vector<16x1xf32>
    %75 = arith.addf %73, %74 : vector<16x1xf32>
    %76 = math.rsqrt %75 : vector<16x1xf32>
    %77 = vector.broadcast %76 : vector<16x1xf32> to vector<16x32xf32>
    %78 = arith.mulf %71, %77 : vector<16x32xf32>
    %79 = vector.broadcast %58 : vector<1x32xf32> to vector<16x32xf32>
    %80 = arith.mulf %78, %79 : vector<16x32xf32>
    %81 = vector.broadcast %60 : vector<1x32xf32> to vector<16x32xf32>
    %82 = arith.addf %80, %81 : vector<16x32xf32>
    %83 = arith.truncf %82 : vector<16x32xf32> to vector<16x32xbf16>
    %c0_36 = arith.constant 0 : index
    %c0_37 = arith.constant 0 : index
    %c0_38 = arith.constant 0 : index
    %84 = vector.load %arg8[%c0_36, %c0_37, %c0_38] : memref<3x32x256xbf16, #tpu.memory_space<vmem>>, vector<1x32x256xbf16>
    %85 = vector.shape_cast %84 : vector<1x32x256xbf16> to vector<32x256xbf16>
    %cst_39 = arith.constant dense<0.000000e+00> : vector<16x256xf32>
    %86 = tpu.matmul %83, %85, %cst_39 {dimension_numbers = #tpu.dot_dimension_numbers<[1], [0], [0], [1], [0, 0, 1, 1], [], []>} : vector<16x32xbf16>, vector<32x256xbf16>, vector<16x256xf32> -> vector<16x256xf32>
    %c0_40 = arith.constant 0 : index
    %c0_41 = arith.constant 0 : index
    %c0_42 = arith.constant 0 : index
    %87 = vector.load %arg9[%c0_40, %c0_41, %c0_42] : memref<3x1x256xf32, #tpu.memory_space<vmem>>, vector<1x1x256xf32>
    %88 = vector.shape_cast %87 : vector<1x1x256xf32> to vector<1x256xf32>
    %89 = vector.broadcast %88 : vector<1x256xf32> to vector<16x256xf32>
    %90 = arith.addf %86, %89 : vector<16x256xf32>
    %cst_43 = arith.constant 0.000000e+00 : f32
    %91 = vector.broadcast %cst_43 : f32 to vector<16x256xf32>
    %92 = arith.maximumf %90, %91 : vector<16x256xf32>
    %93 = arith.truncf %92 : vector<16x256xf32> to vector<16x256xbf16>
    %c0_44 = arith.constant 0 : index
    %c0_45 = arith.constant 0 : index
    %c0_46 = arith.constant 0 : index
    %94 = vector.load %arg10[%c0_44, %c0_45, %c0_46] : memref<3x256x32xbf16, #tpu.memory_space<vmem>>, vector<1x256x32xbf16>
    %95 = vector.shape_cast %94 : vector<1x256x32xbf16> to vector<256x32xbf16>
    %cst_47 = arith.constant dense<0.000000e+00> : vector<16x32xf32>
    %96 = tpu.matmul %93, %95, %cst_47 {dimension_numbers = #tpu.dot_dimension_numbers<[1], [0], [0], [1], [0, 0, 1, 1], [], []>} : vector<16x256xbf16>, vector<256x32xbf16>, vector<16x32xf32> -> vector<16x32xf32>
    %c0_48 = arith.constant 0 : index
    %c0_49 = arith.constant 0 : index
    %c0_50 = arith.constant 0 : index
    %97 = vector.load %arg11[%c0_48, %c0_49, %c0_50] : memref<3x1x32xf32, #tpu.memory_space<vmem>>, vector<1x1x32xf32>
    %98 = vector.shape_cast %97 : vector<1x1x32xf32> to vector<1x32xf32>
    %99 = vector.broadcast %98 : vector<1x32xf32> to vector<16x32xf32>
    %100 = arith.addf %96, %99 : vector<16x32xf32>
    %101 = arith.addf %82, %100 : vector<16x32xf32>
    %c0_51 = arith.constant 0 : index
    %c0_52 = arith.constant 0 : index
    %c0_53 = arith.constant 0 : index
    %102 = vector.load %arg14[%c0_51, %c0_52, %c0_53] : memref<3x1x32xf32, #tpu.memory_space<vmem>>, vector<1x1x32xf32>
    %103 = vector.shape_cast %102 : vector<1x1x32xf32> to vector<1x32xf32>
    %c0_54 = arith.constant 0 : index
    %c0_55 = arith.constant 0 : index
    %c0_56 = arith.constant 0 : index
    %104 = vector.load %arg15[%c0_54, %c0_55, %c0_56] : memref<3x1x32xf32, #tpu.memory_space<vmem>>, vector<1x1x32xf32>
    %105 = vector.shape_cast %104 : vector<1x1x32xf32> to vector<1x32xf32>
    %cst_57 = arith.constant dense<0.000000e+00> : vector<16xf32>
    %106 = vector.multi_reduction <add>, %101, %cst_57 [1] : vector<16x32xf32> to vector<16xf32>
    %107 = vector.shape_cast %106 : vector<16xf32> to vector<16x1xf32>
    %cst_58 = arith.constant 3.200000e+01 : f32
    %108 = vector.broadcast %cst_58 : f32 to vector<16x1xf32>
    %109 = arith.divf %107, %108 : vector<16x1xf32>
    %110 = arith.mulf %101, %101 : vector<16x32xf32>
    %cst_59 = arith.constant dense<0.000000e+00> : vector<16xf32>
    %111 = vector.multi_reduction <add>, %110, %cst_59 [1] : vector<16x32xf32> to vector<16xf32>
    %112 = vector.shape_cast %111 : vector<16xf32> to vector<16x1xf32>
    %cst_60 = arith.constant 3.200000e+01 : f32
    %113 = vector.broadcast %cst_60 : f32 to vector<16x1xf32>
    %114 = arith.divf %112, %113 : vector<16x1xf32>
    %115 = vector.broadcast %109 : vector<16x1xf32> to vector<16x32xf32>
    %116 = arith.subf %101, %115 : vector<16x32xf32>
    %117 = arith.mulf %109, %109 : vector<16x1xf32>
    %118 = arith.subf %114, %117 : vector<16x1xf32>
    %cst_61 = arith.constant 9.99999974E-6 : f32
    %119 = vector.broadcast %cst_61 : f32 to vector<16x1xf32>
    %120 = arith.addf %118, %119 : vector<16x1xf32>
    %121 = math.rsqrt %120 : vector<16x1xf32>
    %122 = vector.broadcast %121 : vector<16x1xf32> to vector<16x32xf32>
    %123 = arith.mulf %116, %122 : vector<16x32xf32>
    %124 = vector.broadcast %103 : vector<1x32xf32> to vector<16x32xf32>
    %125 = arith.mulf %123, %124 : vector<16x32xf32>
    %126 = vector.broadcast %105 : vector<1x32xf32> to vector<16x32xf32>
    %127 = arith.addf %125, %126 : vector<16x32xf32>
    %128 = arith.truncf %127 : vector<16x32xf32> to vector<16x32xbf16>
    %c1 = arith.constant 1 : index
    %c0_62 = arith.constant 0 : index
    %c0_63 = arith.constant 0 : index
    %129 = vector.load %arg4[%c1, %c0_62, %c0_63] : memref<3x32x128xbf16, #tpu.memory_space<vmem>>, vector<1x32x128xbf16>
    %130 = vector.shape_cast %129 : vector<1x32x128xbf16> to vector<32x128xbf16>
    %cst_64 = arith.constant dense<0.000000e+00> : vector<16x128xf32>
    %131 = tpu.matmul %128, %130, %cst_64 {dimension_numbers = #tpu.dot_dimension_numbers<[1], [0], [0], [1], [0, 0, 1, 1], [], []>} : vector<16x32xbf16>, vector<32x128xbf16>, vector<16x128xf32> -> vector<16x128xf32>
    %c1_65 = arith.constant 1 : index
    %c0_66 = arith.constant 0 : index
    %c0_67 = arith.constant 0 : index
    %132 = vector.load %arg5[%c1_65, %c0_66, %c0_67] : memref<3x1x128xf32, #tpu.memory_space<vmem>>, vector<1x1x128xf32>
    %133 = vector.shape_cast %132 : vector<1x1x128xf32> to vector<1x128xf32>
    %134 = vector.broadcast %133 : vector<1x128xf32> to vector<16x128xf32>
    %135 = arith.addf %131, %134 : vector<16x128xf32>
    %136 = vector.extract_strided_slice %135 {offsets = [0, 0], sizes = [16, 32], strides = [1, 1]} : vector<16x128xf32> to vector<16x32xf32>
    %137 = vector.shape_cast %136 : vector<16x32xf32> to vector<2x8x32xf32>
    %138 = vector.extract_strided_slice %135 {offsets = [0, 32], sizes = [16, 32], strides = [1, 1]} : vector<16x128xf32> to vector<16x32xf32>
    %139 = vector.shape_cast %138 : vector<16x32xf32> to vector<2x8x32xf32>
    %140 = vector.extract_strided_slice %135 {offsets = [0, 64], sizes = [16, 32], strides = [1, 1]} : vector<16x128xf32> to vector<16x32xf32>
    %141 = vector.shape_cast %140 : vector<16x32xf32> to vector<2x8x32xf32>
    %142 = vector.extract_strided_slice %139 {offsets = [0, 0, 0], sizes = [1, 8, 32], strides = [1, 1, 1]} : vector<2x8x32xf32> to vector<1x8x32xf32>
    %143 = vector.extract_strided_slice %139 {offsets = [1, 0, 0], sizes = [1, 8, 32], strides = [1, 1, 1]} : vector<2x8x32xf32> to vector<1x8x32xf32>
    %144 = arith.subf %142, %143 : vector<1x8x32xf32>
    %145 = vector.broadcast %144 : vector<1x8x32xf32> to vector<2x8x32xf32>
    %146 = arith.mulf %137, %145 : vector<2x8x32xf32>
    %147 = vector.shape_cast %146 : vector<2x8x32xf32> to vector<16x32xf32>
    %148 = arith.truncf %147 : vector<16x32xf32> to vector<16x32xbf16>
    %cst_68 = arith.constant dense<0.000000e+00> : vector<16x4xf32>
    %149 = tpu.matmul %148, %6, %cst_68 {dimension_numbers = #tpu.dot_dimension_numbers<[1], [0], [0], [1], [0, 0, 1, 1], [], []>} : vector<16x32xbf16>, vector<32x4xbf16>, vector<16x4xf32> -> vector<16x4xf32>
    %cst_69 = arith.constant 0.000000e+00 : f32
    %150 = vector.broadcast %cst_69 : f32 to vector<16x4xf32>
    %151 = arith.subf %150, %149 : vector<16x4xf32>
    %152 = math.exp %151 : vector<16x4xf32>
    %cst_70 = arith.constant 1.000000e+00 : f32
    %153 = vector.broadcast %cst_70 : f32 to vector<16x4xf32>
    %154 = arith.addf %153, %152 : vector<16x4xf32>
    %155 = tpu.reciprocal %154 {approx = true} : vector<16x4xf32> -> vector<16x4xf32>
    %156 = arith.truncf %155 : vector<16x4xf32> to vector<16x4xbf16>
    %cst_71 = arith.constant dense<0.000000e+00> : vector<16x32xf32>
    %157 = tpu.matmul %156, %7, %cst_71 {dimension_numbers = #tpu.dot_dimension_numbers<[1], [0], [0], [1], [0, 0, 1, 1], [], []>} : vector<16x4xbf16>, vector<4x32xbf16>, vector<16x32xf32> -> vector<16x32xf32>
    %158 = vector.shape_cast %157 : vector<16x32xf32> to vector<2x8x32xf32>
    %159 = vector.extract_strided_slice %141 {offsets = [1, 0, 0], sizes = [1, 8, 32], strides = [1, 1, 1]} : vector<2x8x32xf32> to vector<1x8x32xf32>
    %160 = vector.extract_strided_slice %141 {offsets = [0, 0, 0], sizes = [1, 8, 32], strides = [1, 1, 1]} : vector<2x8x32xf32> to vector<1x8x32xf32>
    %161 = vector.extract_strided_slice %141 {offsets = [1, 0, 0], sizes = [1, 8, 32], strides = [1, 1, 1]} : vector<2x8x32xf32> to vector<1x8x32xf32>
    %162 = arith.subf %160, %161 : vector<1x8x32xf32>
    %163 = vector.broadcast %162 : vector<1x8x32xf32> to vector<2x8x32xf32>
    %164 = arith.mulf %158, %163 : vector<2x8x32xf32>
    %165 = vector.broadcast %159 : vector<1x8x32xf32> to vector<2x8x32xf32>
    %166 = arith.addf %165, %164 : vector<2x8x32xf32>
    %167 = vector.shape_cast %166 : vector<2x8x32xf32> to vector<16x32xf32>
    %168 = arith.truncf %167 : vector<16x32xf32> to vector<16x32xbf16>
    %c1_72 = arith.constant 1 : index
    %c0_73 = arith.constant 0 : index
    %c0_74 = arith.constant 0 : index
    %169 = vector.load %arg6[%c1_72, %c0_73, %c0_74] : memref<3x32x32xbf16, #tpu.memory_space<vmem>>, vector<1x32x32xbf16>
    %170 = vector.shape_cast %169 : vector<1x32x32xbf16> to vector<32x32xbf16>
    %cst_75 = arith.constant dense<0.000000e+00> : vector<16x32xf32>
    %171 = tpu.matmul %168, %170, %cst_75 {dimension_numbers = #tpu.dot_dimension_numbers<[1], [0], [0], [1], [0, 0, 1, 1], [], []>} : vector<16x32xbf16>, vector<32x32xbf16>, vector<16x32xf32> -> vector<16x32xf32>
    %c1_76 = arith.constant 1 : index
    %c0_77 = arith.constant 0 : index
    %c0_78 = arith.constant 0 : index
    %172 = vector.load %arg7[%c1_76, %c0_77, %c0_78] : memref<3x1x32xf32, #tpu.memory_space<vmem>>, vector<1x1x32xf32>
    %173 = vector.shape_cast %172 : vector<1x1x32xf32> to vector<1x32xf32>
    %174 = vector.broadcast %173 : vector<1x32xf32> to vector<16x32xf32>
    %175 = arith.addf %171, %174 : vector<16x32xf32>
    %176 = arith.addf %127, %175 : vector<16x32xf32>
    %c1_79 = arith.constant 1 : index
    %c0_80 = arith.constant 0 : index
    %c0_81 = arith.constant 0 : index
    %177 = vector.load %arg12[%c1_79, %c0_80, %c0_81] : memref<3x1x32xf32, #tpu.memory_space<vmem>>, vector<1x1x32xf32>
    %178 = vector.shape_cast %177 : vector<1x1x32xf32> to vector<1x32xf32>
    %c1_82 = arith.constant 1 : index
    %c0_83 = arith.constant 0 : index
    %c0_84 = arith.constant 0 : index
    %179 = vector.load %arg13[%c1_82, %c0_83, %c0_84] : memref<3x1x32xf32, #tpu.memory_space<vmem>>, vector<1x1x32xf32>
    %180 = vector.shape_cast %179 : vector<1x1x32xf32> to vector<1x32xf32>
    %cst_85 = arith.constant dense<0.000000e+00> : vector<16xf32>
    %181 = vector.multi_reduction <add>, %176, %cst_85 [1] : vector<16x32xf32> to vector<16xf32>
    %182 = vector.shape_cast %181 : vector<16xf32> to vector<16x1xf32>
    %cst_86 = arith.constant 3.200000e+01 : f32
    %183 = vector.broadcast %cst_86 : f32 to vector<16x1xf32>
    %184 = arith.divf %182, %183 : vector<16x1xf32>
    %185 = arith.mulf %176, %176 : vector<16x32xf32>
    %cst_87 = arith.constant dense<0.000000e+00> : vector<16xf32>
    %186 = vector.multi_reduction <add>, %185, %cst_87 [1] : vector<16x32xf32> to vector<16xf32>
    %187 = vector.shape_cast %186 : vector<16xf32> to vector<16x1xf32>
    %cst_88 = arith.constant 3.200000e+01 : f32
    %188 = vector.broadcast %cst_88 : f32 to vector<16x1xf32>
    %189 = arith.divf %187, %188 : vector<16x1xf32>
    %190 = vector.broadcast %184 : vector<16x1xf32> to vector<16x32xf32>
    %191 = arith.subf %176, %190 : vector<16x32xf32>
    %192 = arith.mulf %184, %184 : vector<16x1xf32>
    %193 = arith.subf %189, %192 : vector<16x1xf32>
    %cst_89 = arith.constant 9.99999974E-6 : f32
    %194 = vector.broadcast %cst_89 : f32 to vector<16x1xf32>
    %195 = arith.addf %193, %194 : vector<16x1xf32>
    %196 = math.rsqrt %195 : vector<16x1xf32>
    %197 = vector.broadcast %196 : vector<16x1xf32> to vector<16x32xf32>
    %198 = arith.mulf %191, %197 : vector<16x32xf32>
    %199 = vector.broadcast %178 : vector<1x32xf32> to vector<16x32xf32>
    %200 = arith.mulf %198, %199 : vector<16x32xf32>
    %201 = vector.broadcast %180 : vector<1x32xf32> to vector<16x32xf32>
    %202 = arith.addf %200, %201 : vector<16x32xf32>
    %203 = arith.truncf %202 : vector<16x32xf32> to vector<16x32xbf16>
    %c1_90 = arith.constant 1 : index
    %c0_91 = arith.constant 0 : index
    %c0_92 = arith.constant 0 : index
    %204 = vector.load %arg8[%c1_90, %c0_91, %c0_92] : memref<3x32x256xbf16, #tpu.memory_space<vmem>>, vector<1x32x256xbf16>
    %205 = vector.shape_cast %204 : vector<1x32x256xbf16> to vector<32x256xbf16>
    %cst_93 = arith.constant dense<0.000000e+00> : vector<16x256xf32>
    %206 = tpu.matmul %203, %205, %cst_93 {dimension_numbers = #tpu.dot_dimension_numbers<[1], [0], [0], [1], [0, 0, 1, 1], [], []>} : vector<16x32xbf16>, vector<32x256xbf16>, vector<16x256xf32> -> vector<16x256xf32>
    %c1_94 = arith.constant 1 : index
    %c0_95 = arith.constant 0 : index
    %c0_96 = arith.constant 0 : index
    %207 = vector.load %arg9[%c1_94, %c0_95, %c0_96] : memref<3x1x256xf32, #tpu.memory_space<vmem>>, vector<1x1x256xf32>
    %208 = vector.shape_cast %207 : vector<1x1x256xf32> to vector<1x256xf32>
    %209 = vector.broadcast %208 : vector<1x256xf32> to vector<16x256xf32>
    %210 = arith.addf %206, %209 : vector<16x256xf32>
    %cst_97 = arith.constant 0.000000e+00 : f32
    %211 = vector.broadcast %cst_97 : f32 to vector<16x256xf32>
    %212 = arith.maximumf %210, %211 : vector<16x256xf32>
    %213 = arith.truncf %212 : vector<16x256xf32> to vector<16x256xbf16>
    %c1_98 = arith.constant 1 : index
    %c0_99 = arith.constant 0 : index
    %c0_100 = arith.constant 0 : index
    %214 = vector.load %arg10[%c1_98, %c0_99, %c0_100] : memref<3x256x32xbf16, #tpu.memory_space<vmem>>, vector<1x256x32xbf16>
    %215 = vector.shape_cast %214 : vector<1x256x32xbf16> to vector<256x32xbf16>
    %cst_101 = arith.constant dense<0.000000e+00> : vector<16x32xf32>
    %216 = tpu.matmul %213, %215, %cst_101 {dimension_numbers = #tpu.dot_dimension_numbers<[1], [0], [0], [1], [0, 0, 1, 1], [], []>} : vector<16x256xbf16>, vector<256x32xbf16>, vector<16x32xf32> -> vector<16x32xf32>
    %c1_102 = arith.constant 1 : index
    %c0_103 = arith.constant 0 : index
    %c0_104 = arith.constant 0 : index
    %217 = vector.load %arg11[%c1_102, %c0_103, %c0_104] : memref<3x1x32xf32, #tpu.memory_space<vmem>>, vector<1x1x32xf32>
    %218 = vector.shape_cast %217 : vector<1x1x32xf32> to vector<1x32xf32>
    %219 = vector.broadcast %218 : vector<1x32xf32> to vector<16x32xf32>
    %220 = arith.addf %216, %219 : vector<16x32xf32>
    %221 = arith.addf %202, %220 : vector<16x32xf32>
    %c1_105 = arith.constant 1 : index
    %c0_106 = arith.constant 0 : index
    %c0_107 = arith.constant 0 : index
    %222 = vector.load %arg14[%c1_105, %c0_106, %c0_107] : memref<3x1x32xf32, #tpu.memory_space<vmem>>, vector<1x1x32xf32>
    %223 = vector.shape_cast %222 : vector<1x1x32xf32> to vector<1x32xf32>
    %c1_108 = arith.constant 1 : index
    %c0_109 = arith.constant 0 : index
    %c0_110 = arith.constant 0 : index
    %224 = vector.load %arg15[%c1_108, %c0_109, %c0_110] : memref<3x1x32xf32, #tpu.memory_space<vmem>>, vector<1x1x32xf32>
    %225 = vector.shape_cast %224 : vector<1x1x32xf32> to vector<1x32xf32>
    %cst_111 = arith.constant dense<0.000000e+00> : vector<16xf32>
    %226 = vector.multi_reduction <add>, %221, %cst_111 [1] : vector<16x32xf32> to vector<16xf32>
    %227 = vector.shape_cast %226 : vector<16xf32> to vector<16x1xf32>
    %cst_112 = arith.constant 3.200000e+01 : f32
    %228 = vector.broadcast %cst_112 : f32 to vector<16x1xf32>
    %229 = arith.divf %227, %228 : vector<16x1xf32>
    %230 = arith.mulf %221, %221 : vector<16x32xf32>
    %cst_113 = arith.constant dense<0.000000e+00> : vector<16xf32>
    %231 = vector.multi_reduction <add>, %230, %cst_113 [1] : vector<16x32xf32> to vector<16xf32>
    %232 = vector.shape_cast %231 : vector<16xf32> to vector<16x1xf32>
    %cst_114 = arith.constant 3.200000e+01 : f32
    %233 = vector.broadcast %cst_114 : f32 to vector<16x1xf32>
    %234 = arith.divf %232, %233 : vector<16x1xf32>
    %235 = vector.broadcast %229 : vector<16x1xf32> to vector<16x32xf32>
    %236 = arith.subf %221, %235 : vector<16x32xf32>
    %237 = arith.mulf %229, %229 : vector<16x1xf32>
    %238 = arith.subf %234, %237 : vector<16x1xf32>
    %cst_115 = arith.constant 9.99999974E-6 : f32
    %239 = vector.broadcast %cst_115 : f32 to vector<16x1xf32>
    %240 = arith.addf %238, %239 : vector<16x1xf32>
    %241 = math.rsqrt %240 : vector<16x1xf32>
    %242 = vector.broadcast %241 : vector<16x1xf32> to vector<16x32xf32>
    %243 = arith.mulf %236, %242 : vector<16x32xf32>
    %244 = vector.broadcast %223 : vector<1x32xf32> to vector<16x32xf32>
    %245 = arith.mulf %243, %244 : vector<16x32xf32>
    %246 = vector.broadcast %225 : vector<1x32xf32> to vector<16x32xf32>
    %247 = arith.addf %245, %246 : vector<16x32xf32>
    %248 = arith.truncf %247 : vector<16x32xf32> to vector<16x32xbf16>
    %c2 = arith.constant 2 : index
    %c0_116 = arith.constant 0 : index
    %c0_117 = arith.constant 0 : index
    %249 = vector.load %arg4[%c2, %c0_116, %c0_117] : memref<3x32x128xbf16, #tpu.memory_space<vmem>>, vector<1x32x128xbf16>
    %250 = vector.shape_cast %249 : vector<1x32x128xbf16> to vector<32x128xbf16>
    %cst_118 = arith.constant dense<0.000000e+00> : vector<16x128xf32>
    %251 = tpu.matmul %248, %250, %cst_118 {dimension_numbers = #tpu.dot_dimension_numbers<[1], [0], [0], [1], [0, 0, 1, 1], [], []>} : vector<16x32xbf16>, vector<32x128xbf16>, vector<16x128xf32> -> vector<16x128xf32>
    %c2_119 = arith.constant 2 : index
    %c0_120 = arith.constant 0 : index
    %c0_121 = arith.constant 0 : index
    %252 = vector.load %arg5[%c2_119, %c0_120, %c0_121] : memref<3x1x128xf32, #tpu.memory_space<vmem>>, vector<1x1x128xf32>
    %253 = vector.shape_cast %252 : vector<1x1x128xf32> to vector<1x128xf32>
    %254 = vector.broadcast %253 : vector<1x128xf32> to vector<16x128xf32>
    %255 = arith.addf %251, %254 : vector<16x128xf32>
    %256 = vector.extract_strided_slice %255 {offsets = [0, 0], sizes = [16, 32], strides = [1, 1]} : vector<16x128xf32> to vector<16x32xf32>
    %257 = vector.shape_cast %256 : vector<16x32xf32> to vector<2x8x32xf32>
    %258 = vector.extract_strided_slice %255 {offsets = [0, 32], sizes = [16, 32], strides = [1, 1]} : vector<16x128xf32> to vector<16x32xf32>
    %259 = vector.shape_cast %258 : vector<16x32xf32> to vector<2x8x32xf32>
    %260 = vector.extract_strided_slice %255 {offsets = [0, 64], sizes = [16, 32], strides = [1, 1]} : vector<16x128xf32> to vector<16x32xf32>
    %261 = vector.shape_cast %260 : vector<16x32xf32> to vector<2x8x32xf32>
    %262 = vector.extract_strided_slice %259 {offsets = [0, 0, 0], sizes = [1, 8, 32], strides = [1, 1, 1]} : vector<2x8x32xf32> to vector<1x8x32xf32>
    %263 = vector.extract_strided_slice %259 {offsets = [1, 0, 0], sizes = [1, 8, 32], strides = [1, 1, 1]} : vector<2x8x32xf32> to vector<1x8x32xf32>
    %264 = arith.subf %262, %263 : vector<1x8x32xf32>
    %265 = vector.broadcast %264 : vector<1x8x32xf32> to vector<2x8x32xf32>
    %266 = arith.mulf %257, %265 : vector<2x8x32xf32>
    %267 = vector.shape_cast %266 : vector<2x8x32xf32> to vector<16x32xf32>
    %268 = arith.truncf %267 : vector<16x32xf32> to vector<16x32xbf16>
    %cst_122 = arith.constant dense<0.000000e+00> : vector<16x4xf32>
    %269 = tpu.matmul %268, %6, %cst_122 {dimension_numbers = #tpu.dot_dimension_numbers<[1], [0], [0], [1], [0, 0, 1, 1], [], []>} : vector<16x32xbf16>, vector<32x4xbf16>, vector<16x4xf32> -> vector<16x4xf32>
    %cst_123 = arith.constant 0.000000e+00 : f32
    %270 = vector.broadcast %cst_123 : f32 to vector<16x4xf32>
    %271 = arith.subf %270, %269 : vector<16x4xf32>
    %272 = math.exp %271 : vector<16x4xf32>
    %cst_124 = arith.constant 1.000000e+00 : f32
    %273 = vector.broadcast %cst_124 : f32 to vector<16x4xf32>
    %274 = arith.addf %273, %272 : vector<16x4xf32>
    %275 = tpu.reciprocal %274 {approx = true} : vector<16x4xf32> -> vector<16x4xf32>
    %276 = arith.truncf %275 : vector<16x4xf32> to vector<16x4xbf16>
    %cst_125 = arith.constant dense<0.000000e+00> : vector<16x32xf32>
    %277 = tpu.matmul %276, %7, %cst_125 {dimension_numbers = #tpu.dot_dimension_numbers<[1], [0], [0], [1], [0, 0, 1, 1], [], []>} : vector<16x4xbf16>, vector<4x32xbf16>, vector<16x32xf32> -> vector<16x32xf32>
    %278 = vector.shape_cast %277 : vector<16x32xf32> to vector<2x8x32xf32>
    %279 = vector.extract_strided_slice %261 {offsets = [1, 0, 0], sizes = [1, 8, 32], strides = [1, 1, 1]} : vector<2x8x32xf32> to vector<1x8x32xf32>
    %280 = vector.extract_strided_slice %261 {offsets = [0, 0, 0], sizes = [1, 8, 32], strides = [1, 1, 1]} : vector<2x8x32xf32> to vector<1x8x32xf32>
    %281 = vector.extract_strided_slice %261 {offsets = [1, 0, 0], sizes = [1, 8, 32], strides = [1, 1, 1]} : vector<2x8x32xf32> to vector<1x8x32xf32>
    %282 = arith.subf %280, %281 : vector<1x8x32xf32>
    %283 = vector.broadcast %282 : vector<1x8x32xf32> to vector<2x8x32xf32>
    %284 = arith.mulf %278, %283 : vector<2x8x32xf32>
    %285 = vector.broadcast %279 : vector<1x8x32xf32> to vector<2x8x32xf32>
    %286 = arith.addf %285, %284 : vector<2x8x32xf32>
    %287 = vector.shape_cast %286 : vector<2x8x32xf32> to vector<16x32xf32>
    %288 = arith.truncf %287 : vector<16x32xf32> to vector<16x32xbf16>
    %c2_126 = arith.constant 2 : index
    %c0_127 = arith.constant 0 : index
    %c0_128 = arith.constant 0 : index
    %289 = vector.load %arg6[%c2_126, %c0_127, %c0_128] : memref<3x32x32xbf16, #tpu.memory_space<vmem>>, vector<1x32x32xbf16>
    %290 = vector.shape_cast %289 : vector<1x32x32xbf16> to vector<32x32xbf16>
    %cst_129 = arith.constant dense<0.000000e+00> : vector<16x32xf32>
    %291 = tpu.matmul %288, %290, %cst_129 {dimension_numbers = #tpu.dot_dimension_numbers<[1], [0], [0], [1], [0, 0, 1, 1], [], []>} : vector<16x32xbf16>, vector<32x32xbf16>, vector<16x32xf32> -> vector<16x32xf32>
    %c2_130 = arith.constant 2 : index
    %c0_131 = arith.constant 0 : index
    %c0_132 = arith.constant 0 : index
    %292 = vector.load %arg7[%c2_130, %c0_131, %c0_132] : memref<3x1x32xf32, #tpu.memory_space<vmem>>, vector<1x1x32xf32>
    %293 = vector.shape_cast %292 : vector<1x1x32xf32> to vector<1x32xf32>
    %294 = vector.broadcast %293 : vector<1x32xf32> to vector<16x32xf32>
    %295 = arith.addf %291, %294 : vector<16x32xf32>
    %296 = arith.addf %247, %295 : vector<16x32xf32>
    %c2_133 = arith.constant 2 : index
    %c0_134 = arith.constant 0 : index
    %c0_135 = arith.constant 0 : index
    %297 = vector.load %arg12[%c2_133, %c0_134, %c0_135] : memref<3x1x32xf32, #tpu.memory_space<vmem>>, vector<1x1x32xf32>
    %298 = vector.shape_cast %297 : vector<1x1x32xf32> to vector<1x32xf32>
    %c2_136 = arith.constant 2 : index
    %c0_137 = arith.constant 0 : index
    %c0_138 = arith.constant 0 : index
    %299 = vector.load %arg13[%c2_136, %c0_137, %c0_138] : memref<3x1x32xf32, #tpu.memory_space<vmem>>, vector<1x1x32xf32>
    %300 = vector.shape_cast %299 : vector<1x1x32xf32> to vector<1x32xf32>
    %cst_139 = arith.constant dense<0.000000e+00> : vector<16xf32>
    %301 = vector.multi_reduction <add>, %296, %cst_139 [1] : vector<16x32xf32> to vector<16xf32>
    %302 = vector.shape_cast %301 : vector<16xf32> to vector<16x1xf32>
    %cst_140 = arith.constant 3.200000e+01 : f32
    %303 = vector.broadcast %cst_140 : f32 to vector<16x1xf32>
    %304 = arith.divf %302, %303 : vector<16x1xf32>
    %305 = arith.mulf %296, %296 : vector<16x32xf32>
    %cst_141 = arith.constant dense<0.000000e+00> : vector<16xf32>
    %306 = vector.multi_reduction <add>, %305, %cst_141 [1] : vector<16x32xf32> to vector<16xf32>
    %307 = vector.shape_cast %306 : vector<16xf32> to vector<16x1xf32>
    %cst_142 = arith.constant 3.200000e+01 : f32
    %308 = vector.broadcast %cst_142 : f32 to vector<16x1xf32>
    %309 = arith.divf %307, %308 : vector<16x1xf32>
    %310 = vector.broadcast %304 : vector<16x1xf32> to vector<16x32xf32>
    %311 = arith.subf %296, %310 : vector<16x32xf32>
    %312 = arith.mulf %304, %304 : vector<16x1xf32>
    %313 = arith.subf %309, %312 : vector<16x1xf32>
    %cst_143 = arith.constant 9.99999974E-6 : f32
    %314 = vector.broadcast %cst_143 : f32 to vector<16x1xf32>
    %315 = arith.addf %313, %314 : vector<16x1xf32>
    %316 = math.rsqrt %315 : vector<16x1xf32>
    %317 = vector.broadcast %316 : vector<16x1xf32> to vector<16x32xf32>
    %318 = arith.mulf %311, %317 : vector<16x32xf32>
    %319 = vector.broadcast %298 : vector<1x32xf32> to vector<16x32xf32>
    %320 = arith.mulf %318, %319 : vector<16x32xf32>
    %321 = vector.broadcast %300 : vector<1x32xf32> to vector<16x32xf32>
    %322 = arith.addf %320, %321 : vector<16x32xf32>
    %323 = arith.truncf %322 : vector<16x32xf32> to vector<16x32xbf16>
    %c2_144 = arith.constant 2 : index
    %c0_145 = arith.constant 0 : index
    %c0_146 = arith.constant 0 : index
    %324 = vector.load %arg8[%c2_144, %c0_145, %c0_146] : memref<3x32x256xbf16, #tpu.memory_space<vmem>>, vector<1x32x256xbf16>
    %325 = vector.shape_cast %324 : vector<1x32x256xbf16> to vector<32x256xbf16>
    %cst_147 = arith.constant dense<0.000000e+00> : vector<16x256xf32>
    %326 = tpu.matmul %323, %325, %cst_147 {dimension_numbers = #tpu.dot_dimension_numbers<[1], [0], [0], [1], [0, 0, 1, 1], [], []>} : vector<16x32xbf16>, vector<32x256xbf16>, vector<16x256xf32> -> vector<16x256xf32>
    %c2_148 = arith.constant 2 : index
    %c0_149 = arith.constant 0 : index
    %c0_150 = arith.constant 0 : index
    %327 = vector.load %arg9[%c2_148, %c0_149, %c0_150] : memref<3x1x256xf32, #tpu.memory_space<vmem>>, vector<1x1x256xf32>
    %328 = vector.shape_cast %327 : vector<1x1x256xf32> to vector<1x256xf32>
    %329 = vector.broadcast %328 : vector<1x256xf32> to vector<16x256xf32>
    %330 = arith.addf %326, %329 : vector<16x256xf32>
    %cst_151 = arith.constant 0.000000e+00 : f32
    %331 = vector.broadcast %cst_151 : f32 to vector<16x256xf32>
    %332 = arith.maximumf %330, %331 : vector<16x256xf32>
    %333 = arith.truncf %332 : vector<16x256xf32> to vector<16x256xbf16>
    %c2_152 = arith.constant 2 : index
    %c0_153 = arith.constant 0 : index
    %c0_154 = arith.constant 0 : index
    %334 = vector.load %arg10[%c2_152, %c0_153, %c0_154] : memref<3x256x32xbf16, #tpu.memory_space<vmem>>, vector<1x256x32xbf16>
    %335 = vector.shape_cast %334 : vector<1x256x32xbf16> to vector<256x32xbf16>
    %cst_155 = arith.constant dense<0.000000e+00> : vector<16x32xf32>
    %336 = tpu.matmul %333, %335, %cst_155 {dimension_numbers = #tpu.dot_dimension_numbers<[1], [0], [0], [1], [0, 0, 1, 1], [], []>} : vector<16x256xbf16>, vector<256x32xbf16>, vector<16x32xf32> -> vector<16x32xf32>
    %c2_156 = arith.constant 2 : index
    %c0_157 = arith.constant 0 : index
    %c0_158 = arith.constant 0 : index
    %337 = vector.load %arg11[%c2_156, %c0_157, %c0_158] : memref<3x1x32xf32, #tpu.memory_space<vmem>>, vector<1x1x32xf32>
    %338 = vector.shape_cast %337 : vector<1x1x32xf32> to vector<1x32xf32>
    %339 = vector.broadcast %338 : vector<1x32xf32> to vector<16x32xf32>
    %340 = arith.addf %336, %339 : vector<16x32xf32>
    %341 = arith.addf %322, %340 : vector<16x32xf32>
    %c2_159 = arith.constant 2 : index
    %c0_160 = arith.constant 0 : index
    %c0_161 = arith.constant 0 : index
    %342 = vector.load %arg14[%c2_159, %c0_160, %c0_161] : memref<3x1x32xf32, #tpu.memory_space<vmem>>, vector<1x1x32xf32>
    %343 = vector.shape_cast %342 : vector<1x1x32xf32> to vector<1x32xf32>
    %c2_162 = arith.constant 2 : index
    %c0_163 = arith.constant 0 : index
    %c0_164 = arith.constant 0 : index
    %344 = vector.load %arg15[%c2_162, %c0_163, %c0_164] : memref<3x1x32xf32, #tpu.memory_space<vmem>>, vector<1x1x32xf32>
    %345 = vector.shape_cast %344 : vector<1x1x32xf32> to vector<1x32xf32>
    %cst_165 = arith.constant dense<0.000000e+00> : vector<16xf32>
    %346 = vector.multi_reduction <add>, %341, %cst_165 [1] : vector<16x32xf32> to vector<16xf32>
    %347 = vector.shape_cast %346 : vector<16xf32> to vector<16x1xf32>
    %cst_166 = arith.constant 3.200000e+01 : f32
    %348 = vector.broadcast %cst_166 : f32 to vector<16x1xf32>
    %349 = arith.divf %347, %348 : vector<16x1xf32>
    %350 = arith.mulf %341, %341 : vector<16x32xf32>
    %cst_167 = arith.constant dense<0.000000e+00> : vector<16xf32>
    %351 = vector.multi_reduction <add>, %350, %cst_167 [1] : vector<16x32xf32> to vector<16xf32>
    %352 = vector.shape_cast %351 : vector<16xf32> to vector<16x1xf32>
    %cst_168 = arith.constant 3.200000e+01 : f32
    %353 = vector.broadcast %cst_168 : f32 to vector<16x1xf32>
    %354 = arith.divf %352, %353 : vector<16x1xf32>
    %355 = vector.broadcast %349 : vector<16x1xf32> to vector<16x32xf32>
    %356 = arith.subf %341, %355 : vector<16x32xf32>
    %357 = arith.mulf %349, %349 : vector<16x1xf32>
    %358 = arith.subf %354, %357 : vector<16x1xf32>
    %cst_169 = arith.constant 9.99999974E-6 : f32
    %359 = vector.broadcast %cst_169 : f32 to vector<16x1xf32>
    %360 = arith.addf %358, %359 : vector<16x1xf32>
    %361 = math.rsqrt %360 : vector<16x1xf32>
    %362 = vector.broadcast %361 : vector<16x1xf32> to vector<16x32xf32>
    %363 = arith.mulf %356, %362 : vector<16x32xf32>
    %364 = vector.broadcast %343 : vector<1x32xf32> to vector<16x32xf32>
    %365 = arith.mulf %363, %364 : vector<16x32xf32>
    %366 = vector.broadcast %345 : vector<1x32xf32> to vector<16x32xf32>
    %367 = arith.addf %365, %366 : vector<16x32xf32>
    %368 = vector.shape_cast %367 : vector<16x32xf32> to vector<2x8x32xf32>
    %cst_170 = arith.constant dense<0.000000e+00> : vector<2x32xf32>
    %369 = vector.multi_reduction <add>, %368, %cst_170 [1] : vector<2x8x32xf32> to vector<2x32xf32>
    %cst_171 = arith.constant 8.000000e+00 : f32
    %370 = vector.broadcast %cst_171 : f32 to vector<2x32xf32>
    %371 = arith.divf %369, %370 : vector<2x32xf32>
    %372 = arith.truncf %371 : vector<2x32xf32> to vector<2x32xbf16>
    %c0_172 = arith.constant 0 : index
    %c0_173 = arith.constant 0 : index
    %373 = vector.load %arg16[%c0_172, %c0_173] : memref<32x128xbf16, #tpu.memory_space<vmem>>, vector<32x128xbf16>
    %cst_174 = arith.constant dense<0.000000e+00> : vector<2x128xf32>
    %374 = tpu.matmul %372, %373, %cst_174 {dimension_numbers = #tpu.dot_dimension_numbers<[1], [0], [0], [1], [0, 0, 1, 1], [], []>} : vector<2x32xbf16>, vector<32x128xbf16>, vector<2x128xf32> -> vector<2x128xf32>
    %c0_175 = arith.constant 0 : index
    %c0_176 = arith.constant 0 : index
    %375 = vector.load %arg17[%c0_175, %c0_176] : memref<1x128xf32, #tpu.memory_space<vmem>>, vector<1x128xf32>
    %376 = vector.broadcast %375 : vector<1x128xf32> to vector<2x128xf32>
    %377 = arith.addf %374, %376 : vector<2x128xf32>
    %c0_177 = arith.constant 0 : index
    %c0_178 = arith.constant 0 : index
    %378 = vector.load %arg18[%c0_177, %c0_178] : memref<2x128xf32, #tpu.memory_space<vmem>>, vector<2x128xf32>
    tpu.vector_store %arg18[%c0_177, %c0_178], %377 {strides = array<i32>} : memref<2x128xf32, #tpu.memory_space<vmem>>, vector<2x128xf32>,
    return
  }
}

</mosaic_0001>

<llo_original>
// kernel: tpu_custom_call.1
$region0: #{tpu_custom_call.1}
  #allocation0 [shape = 'u32[]', space=smem, size = 0x4, offset = 0x4, fixed_abs, tag = 'smem constant byte address 0x4 - core index']
  #allocation1 [shape = 'u32[72,128]{1,0:T(1,128)}', space=vmem, size = 0x9000, scoped, tag = 'internal scratch']
  %s0 = inlined_call_operand.vmem [shape: f32[2,8,32], index: 0, kind: input, shape index: {}]
  %s1 = inlined_call_operand.vmem [shape: f32[8,32], index: 1, kind: input, shape index: {}]
  %s2 = inlined_call_operand.vmem [shape: bf16[32,4], index: 2, kind: input, shape index: {}]
  %s3 = inlined_call_operand.vmem [shape: bf16[4,32], index: 3, kind: input, shape index: {}]
  %s4 = inlined_call_operand.vmem [shape: bf16[3,32,128], index: 4, kind: input, shape index: {}]
  %s5 = inlined_call_operand.vmem [shape: f32[3,1,128], index: 5, kind: input, shape index: {}]
  %s6 = inlined_call_operand.vmem [shape: bf16[3,32,32], index: 6, kind: input, shape index: {}]
  %s7 = inlined_call_operand.vmem [shape: f32[3,1,32], index: 7, kind: input, shape index: {}]
  %s8 = inlined_call_operand.vmem [shape: bf16[3,32,256], index: 8, kind: input, shape index: {}]
  %s9 = inlined_call_operand.vmem [shape: f32[3,1,256], index: 9, kind: input, shape index: {}]
  %s10 = inlined_call_operand.vmem [shape: bf16[3,256,32], index: 10, kind: input, shape index: {}]
  %s11 = inlined_call_operand.vmem [shape: f32[3,1,32], index: 11, kind: input, shape index: {}]
  %s12 = inlined_call_operand.vmem [shape: f32[3,1,32], index: 12, kind: input, shape index: {}]
  %s13 = inlined_call_operand.vmem [shape: f32[3,1,32], index: 13, kind: input, shape index: {}]
  %s14 = inlined_call_operand.vmem [shape: f32[3,1,32], index: 14, kind: input, shape index: {}]
  %s15 = inlined_call_operand.vmem [shape: f32[3,1,32], index: 15, kind: input, shape index: {}]
  %s16 = inlined_call_operand.vmem [shape: bf16[32,128], index: 16, kind: input, shape index: {}]
  %s17 = inlined_call_operand.vmem [shape: f32[1,128], index: 17, kind: input, shape index: {}]
  %s18 = inlined_call_operand.hbm [shape: f32[2,128], index: 18, kind: output, shape index: {}]
  %s19 = sld [smem:[#allocation0]]
  $region82: #{tpu_custom_call.1} parent=0
    _
  %s21 = ssub.s32 1, %s19
  %s22 = scalar_select 0, %s21, %s19
  $region1: #{tpu_custom_call.1} parent=0
    #allocation2 [shape = 'u8[1024]{0}', space=vmem, size = 0x400, scoped, tag = 'output window, operand 0, single buffered']
    #allocation3 [shape = 's32[1]{0}', space=sflag, size = 0x4, scoped, tag = 'scoped memory for tpu_custom_call.1']
    %23 = vsyncpa [#allocation3], 0
    // Predicated region
    $region2: #{tpu_custom_call.1} parent=1 // pred_check
      _
    $region3: #{tpu_custom_call.1} parent=1 // pred_check_branch
      %25 = sbr.rel (0) target = $region5
    $region4: #{tpu_custom_call.1} parent=1 // pred_region
      _
    $region5: #{tpu_custom_call.1} parent=1 // pred_fallthru
      _
    // Predicated region
    $region6: #{tpu_custom_call.1} parent=1 // pred_check
      _
    $region7: #{tpu_custom_call.1} parent=1 // pred_check_branch
      %27 = sbr.rel (0) target = $region9
    $region8: #{tpu_custom_call.1} parent=1 // pred_region
      _
    $region9: #{tpu_custom_call.1} parent=1 // pred_fallthru
      _
    // Predicated region
    $region10: #{tpu_custom_call.1} parent=1 // pred_check
      _
    $region11: #{tpu_custom_call.1} parent=1 // pred_check_branch
      %29 = sbr.rel (0) target = $region13
    $region12: #{tpu_custom_call.1} parent=1 // pred_region
      _
    $region13: #{tpu_custom_call.1} parent=1 // pred_fallthru
      _
    // Predicated region
    $region14: #{tpu_custom_call.1} parent=1 // pred_check
      _
    $region15: #{tpu_custom_call.1} parent=1 // pred_check_branch
      %31 = sbr.rel (0) target = $region17
    $region16: #{tpu_custom_call.1} parent=1 // pred_region
      _
    $region17: #{tpu_custom_call.1} parent=1 // pred_fallthru
      _
    // Predicated region
    $region18: #{tpu_custom_call.1} parent=1 // pred_check
      _
    $region19: #{tpu_custom_call.1} parent=1 // pred_check_branch
      %33 = sbr.rel (0) target = $region21
    $region20: #{tpu_custom_call.1} parent=1 // pred_region
      _
    $region21: #{tpu_custom_call.1} parent=1 // pred_fallthru
      _
    // Predicated region
    $region22: #{tpu_custom_call.1} parent=1 // pred_check
      _
    $region23: #{tpu_custom_call.1} parent=1 // pred_check_branch
      %35 = sbr.rel (0) target = $region25
    $region24: #{tpu_custom_call.1} parent=1 // pred_region
      _
    $region25: #{tpu_custom_call.1} parent=1 // pred_fallthru
      _
    // Predicated region
    $region26: #{tpu_custom_call.1} parent=1 // pred_check
      _
    $region27: #{tpu_custom_call.1} parent=1 // pred_check_branch
      %37 = sbr.rel (0) target = $region29
    $region28: #{tpu_custom_call.1} parent=1 // pred_region
      _
    $region29: #{tpu_custom_call.1} parent=1 // pred_fallthru
      _
    // Predicated region
    $region30: #{tpu_custom_call.1} parent=1 // pred_check
      _
    $region31: #{tpu_custom_call.1} parent=1 // pred_check_branch
      %39 = sbr.rel (0) target = $region33
    $region32: #{tpu_custom_call.1} parent=1 // pred_region
      _
    $region33: #{tpu_custom_call.1} parent=1 // pred_fallthru
      _
    // Predicated region
    $region34: #{tpu_custom_call.1} parent=1 // pred_check
      _
    $region35: #{tpu_custom_call.1} parent=1 // pred_check_branch
      %41 = sbr.rel (0) target = $region37
    $region36: #{tpu_custom_call.1} parent=1 // pred_region
      _
    $region37: #{tpu_custom_call.1} parent=1 // pred_fallthru
      _
    // Predicated region
    $region38: #{tpu_custom_call.1} parent=1 // pred_check
      _
    $region39: #{tpu_custom_call.1} parent=1 // pred_check_branch
      %43 = sbr.rel (0) target = $region41
    $region40: #{tpu_custom_call.1} parent=1 // pred_region
      _
    $region41: #{tpu_custom_call.1} parent=1 // pred_fallthru
      _
    // Predicated region
    $region42: #{tpu_custom_call.1} parent=1 // pred_check
      _
    $region43: #{tpu_custom_call.1} parent=1 // pred_check_branch
      %45 = sbr.rel (0) target = $region45
    $region44: #{tpu_custom_call.1} parent=1 // pred_region
      _
    $region45: #{tpu_custom_call.1} parent=1 // pred_fallthru
      _
    // Predicated region
    $region46: #{tpu_custom_call.1} parent=1 // pred_check
      _
    $region47: #{tpu_custom_call.1} parent=1 // pred_check_branch
      %47 = sbr.rel (0) target = $region49
    $region48: #{tpu_custom_call.1} parent=1 // pred_region
      _
    $region49: #{tpu_custom_call.1} parent=1 // pred_fallthru
      _
    // Predicated region
    $region50: #{tpu_custom_call.1} parent=1 // pred_check
      _
    $region51: #{tpu_custom_call.1} parent=1 // pred_check_branch
      %49 = sbr.rel (0) target = $region53
    $region52: #{tpu_custom_call.1} parent=1 // pred_region
      _
    $region53: #{tpu_custom_call.1} parent=1 // pred_fallthru
      _
    // Predicated region
    $region54: #{tpu_custom_call.1} parent=1 // pred_check
      _
    $region55: #{tpu_custom_call.1} parent=1 // pred_check_branch
      %51 = sbr.rel (0) target = $region57
    $region56: #{tpu_custom_call.1} parent=1 // pred_region
      _
    $region57: #{tpu_custom_call.1} parent=1 // pred_fallthru
      _
    // Predicated region
    $region58: #{tpu_custom_call.1} parent=1 // pred_check
      _
    $region59: #{tpu_custom_call.1} parent=1 // pred_check_branch
      %53 = sbr.rel (0) target = $region61
    $region60: #{tpu_custom_call.1} parent=1 // pred_region
      _
    $region61: #{tpu_custom_call.1} parent=1 // pred_fallthru
      _
    // Predicated region
    $region62: #{tpu_custom_call.1} parent=1 // pred_check
      _
    $region63: #{tpu_custom_call.1} parent=1 // pred_check_branch
      %55 = sbr.rel (0) target = $region65
    $region64: #{tpu_custom_call.1} parent=1 // pred_region
      _
    $region65: #{tpu_custom_call.1} parent=1 // pred_fallthru
      _
    // Predicated region
    $region66: #{tpu_custom_call.1} parent=1 // pred_check
      _
    $region67: #{tpu_custom_call.1} parent=1 // pred_check_branch
      %57 = sbr.rel (0) target = $region69
    $region68: #{tpu_custom_call.1} parent=1 // pred_region
      _
    $region69: #{tpu_custom_call.1} parent=1 // pred_fallthru
      _
    // Predicated region
    $region70: #{tpu_custom_call.1} parent=1 // pred_check
      _
    $region71: #{tpu_custom_call.1} parent=1 // pred_check_branch
      %59 = sbr.rel (0) target = $region73
    $region72: #{tpu_custom_call.1} parent=1 // pred_region
      _
    $region73: #{tpu_custom_call.1} parent=1 // pred_fallthru
      _
    %v61 = vld [vmem:[%s0] sm:$0xff]
    %v62 = vld [vmem:[%s0 + $0x8] sm:$0xff]
    %v63 = vld [vmem:[%s1] sm:$0xff]
    %v64 = vadd.f32 %v61, %v63
    %v65 = vadd.f32 %v62, %v63
    %v66 = vld [vmem:[%s2] sm:$0xf]
    %v67 = vld [vmem:[%s2 + $0x4] sm:$0xf]
    %v68 = vld [vmem:[%s2 + $0x8] sm:$0xf]
    %v69 = vld [vmem:[%s2 + $0xc] sm:$0xf]
    %v70 = vld [vmem:[%s3] sm:$0x3]
    %v71 = vpack.c.bf16 %v65, %v64
    %v72 = vld [vmem:[%s4] sm:$0xf]
    %v73 = vld [vmem:[%s4 + $0x4] sm:$0xf]
    %v74 = vld [vmem:[%s4 + $0x8] sm:$0xf]
    %v75 = vld [vmem:[%s4 + $0xc] sm:$0xf]
    %v76 = vld [vmem:[%s5] sm:$0x1]
    %v78 = vperm.slane %v76, 0
    %v84 = vunpack.c.l.b16 %v72
    %v85 = vunpack.c.l.b16 %v73
    %v86 = vunpack.c.l.b16 %v74
    %v87 = vunpack.c.l.b16 %v75
    %v88 = vpack.c.b16 %v85, %v84
    %v89 = vpack.c.b16 %v87, %v86
    %vm92 = vcmask 261120
    %v94 = vsel %vm92, %v71, 0
    %96 = vmatpush.bf16.msra.mxu0 0
    %97 = vmatpush.bf16.msra.mxu0 0
    %98 = vmatpush.bf16.msra.mxu0 0
    %99 = vmatpush.bf16.msra.mxu0 0
    %100 = vmatpush.bf16.msra.mxu0 0
    %101 = vmatpush.bf16.msra.mxu0 0
    %102 = vmatpush.bf16.msra.mxu0 %v89
    %103 = vmatpush.bf16.msra.mxu0 %v88
    %104 = vmatmul.bf16.gmra.mxu0 %v94
    %v105 = vpop.f32.mrf.mxu0
    %v106 = vadd.f32 %v78, %v105
    %v107 = vpop.f32.mrf.mxu0
    %v108 = vadd.f32 %v78, %v107
    %109 = vdwg.mxu0
    %v110 = vsub.f32 %v106, %v108
    %112 = vrot.lane.b32.xlu0 %v110, 96
    %v113 = vpop.permute.xlu0 %112
    %v115 = vmul.f32 %v106, %v113
    %v116 = vmul.f32 %v108, %v113
    %v117 = vpack.c.bf16 %v116, %v115
    %v122 = vunpack.c.l.b16 %v66
    %v123 = vunpack.c.l.b16 %v67
    %v124 = vunpack.c.l.b16 %v68
    %v125 = vunpack.c.l.b16 %v69
    %v126 = vpack.c.b16 %v123, %v122
    %v127 = vpack.c.b16 %v125, %v124
    %v131 = vsel %vm92, %v117, 0
    %133 = vmatpush.bf16.msra.mxu0 0
    %134 = vmatpush.bf16.msra.mxu0 0
    %135 = vmatpush.bf16.msra.mxu0 0
    %136 = vmatpush.bf16.msra.mxu0 0
    %137 = vmatpush.bf16.msra.mxu0 0
    %138 = vmatpush.bf16.msra.mxu0 0
    %139 = vmatpush.bf16.msra.mxu0 %v127
    %140 = vmatpush.bf16.msra.mxu0 %v126
    %141 = vmatmul.bf16.gmra.mxu0 %v131
    %v142 = vpop.f32.mrf.mxu0
    %v143 = vadd.f32 0.0, %v142
    %v144 = vpop.f32.mrf.mxu0
    %v145 = vadd.f32 0.0, %v144
    %146 = vdwg.mxu0
    %v147 = vsub.f32 0.0, %v143
    %v148 = vsub.f32 0.0, %v145
    %v149 = vmul.f32 %v147, 1.442695
    %v150 = vpow.pop %v149
    %v151 = vmul.f32 %v148, 1.442695
    %v152 = vpow.pop %v151
    %v153 = vadd.f32 %v150, 1.0
    %v154 = vadd.f32 %v152, 1.0
    %v155 = vrcp.pop %v153
    %v156 = vrcp.pop %v154
    %v157 = vpack.c.bf16 %v156, %v155
    %vm158 = vcmask 31744
    %v160 = vsel %vm158, %v157, 0
    %vm162 = vcmask 1041408
    %v164 = vsel %vm162, %v70, 0
    %166 = vmatpush.bf16.msra.mxu0 0
    %167 = vmatpush.bf16.msra.mxu0 0
    %168 = vmatpush.bf16.msra.mxu0 0
    %169 = vmatpush.bf16.msra.mxu0 0
    %170 = vmatpush.bf16.msra.mxu0 0
    %171 = vmatpush.bf16.msra.mxu0 0
    %172 = vmatpush.bf16.msra.mxu0 0
    %173 = vmatpush.bf16.msra.mxu0 %v164
    %174 = vmatmul.bf16.gmra.mxu0 %v160
    %v175 = vpop.f32.mrf.mxu0
    %v176 = vadd.f32 0.0, %v175
    %v177 = vpop.f32.mrf.mxu0
    %v178 = vadd.f32 0.0, %v177
    %179 = vdwg.mxu0
    %180 = vrot.lane.b32.xlu0 %v110, 64
    %v181 = vpop.permute.xlu0 %180
    %v183 = vmul.f32 %v176, %v181
    %v184 = vmul.f32 %v178, %v181
    %187 = vrot.lane.b32.xlu0 %v183, 64
    %v188 = vpop.permute.xlu0 %187
    %189 = vrot.lane.b32.xlu0 %v184, 64
    %v190 = vpop.permute.xlu0 %189
    %v193 = vadd.f32 %v108, %v188
    %v194 = vadd.f32 %v108, %v190
    %v195 = vpack.c.bf16 %v194, %v193
    %v196 = vld [vmem:[%s6] sm:$0xf]
    %v197 = vld [vmem:[%s6 + $0x4] sm:$0xf]
    %v198 = vld [vmem:[%s6 + $0x8] sm:$0xf]
    %v199 = vld [vmem:[%s6 + $0xc] sm:$0xf]
    %v200 = vld [vmem:[%s7] sm:$0x1]
    %v202 = vperm.slane %v200, 0
    %205 = vrot.lane.b32.xlu0 %v195, 64
    %v206 = vpop.permute.xlu0 %205
    %v211 = vunpack.c.l.b16 %v196
    %v212 = vunpack.c.l.b16 %v197
    %v213 = vunpack.c.l.b16 %v198
    %v214 = vunpack.c.l.b16 %v199
    %v215 = vpack.c.b16 %v212, %v211
    %v216 = vpack.c.b16 %v214, %v213
    %v220 = vsel %vm92, %v206, 0
    %222 = vmatpush.bf16.msra.mxu0 0
    %223 = vmatpush.bf16.msra.mxu0 0
    %224 = vmatpush.bf16.msra.mxu0 0
    %225 = vmatpush.bf16.msra.mxu0 0
    %226 = vmatpush.bf16.msra.mxu0 0
    %227 = vmatpush.bf16.msra.mxu0 0
    %228 = vmatpush.bf16.msra.mxu0 %v216
    %229 = vmatpush.bf16.msra.mxu0 %v215
    %230 = vmatmul.bf16.gmra.mxu0 %v220
    %v231 = vpop.f32.mrf.mxu0
    %v232 = vadd.f32 %v202, %v231
    %v233 = vpop.f32.mrf.mxu0
    %v234 = vadd.f32 %v202, %v233
    %235 = vdwg.mxu0
    %v236 = vadd.f32 %v64, %v232
    %v237 = vadd.f32 %v65, %v234
    %v238 = vld [vmem:[%s12] sm:$0x1]
    %v239 = vld [vmem:[%s13] sm:$0x1]
    %v240 = vsel %vm92, %v236, 0.0
    %241 = vadd.xlane.f32.xlu0 %v240
    %v242 = vpop.xlane.xlu0 %241
    %v243 = vsel %vm92, %v237, 0.0
    %244 = vadd.xlane.f32.xlu0 %v243
    %v245 = vpop.xlane.xlu0 %244
    %v246 = vrcp.pop 32.0
    %v247 = vmul.f32 32.0, %v246
    %v248 = vsub.f32 1.0, %v247
    %v249 = vmul.f32 %v246, %v248
    %v250 = vadd.f32 %v246, %v249
    %vm251 = vweird.f32 %v246
    %v252 = vsel %vm251, %v246, %v250
    %v253 = vmul.f32 %v242, %v252
    %v254 = vmul.f32 %v245, %v252
    %v255 = vmul.f32 %v236, %v236
    %v256 = vmul.f32 %v237, %v237
    %v257 = vsel %vm92, %v255, 0.0
    %258 = vadd.xlane.f32.xlu0 %v257
    %v259 = vpop.xlane.xlu0 %258
    %v260 = vsel %vm92, %v256, 0.0
    %261 = vadd.xlane.f32.xlu0 %v260
    %v262 = vpop.xlane.xlu0 %261
    %v263 = vmul.f32 %v259, %v252
    %v264 = vmul.f32 %v262, %v252
    %v265 = vsub.f32 %v236, %v253
    %v266 = vsub.f32 %v237, %v254
    %v267 = vmul.f32 %v253, %v253
    %v268 = vmul.f32 %v254, %v254
    %v269 = vsub.f32 %v263, %v267
    %v270 = vsub.f32 %v264, %v268
    %v271 = vadd.f32 %v269, 1e-05
    %v272 = vadd.f32 %v270, 1e-05
    %v273 = vrsqrt.pop %v271
    %v274 = vmul.f32 %v273, %v271
    %v275 = vmul.f32 %v274, %v273
    %v276 = vmul.f32 0.5, %v275
    %v277 = vsub.f32 1.5, %v276
    %v278 = vmul.f32 %v273, %v277
    %vm279 = vweird.f32 %v271
    %vm280 = vweird.f32 %v273
    %vm281 = vmor %vm279, %vm280
    %v282 = vsel %vm281, %v273, %v278
    %v283 = vrsqrt.pop %v272
    %v284 = vmul.f32 %v283, %v272
    %v285 = vmul.f32 %v284, %v283
    %v286 = vmul.f32 0.5, %v285
    %v287 = vsub.f32 1.5, %v286
    %v288 = vmul.f32 %v283, %v287
    %vm289 = vweird.f32 %v272
    %vm290 = vweird.f32 %v283
    %vm291 = vmor %vm289, %vm290
    %v292 = vsel %vm291, %v283, %v288
    %v293 = vmul.f32 %v265, %v282
    %v294 = vmul.f32 %v266, %v292
    %v296 = vperm.slane %v238, 0
    %v298 = vmul.f32 %v293, %v296
    %v299 = vmul.f32 %v294, %v296
    %v301 = vperm.slane %v239, 0
    %v303 = vadd.f32 %v298, %v301
    %v304 = vadd.f32 %v299, %v301
    %v305 = vpack.c.bf16 %v304, %v303
    %v306 = vld [vmem:[%s8] sm:$0xff]
    %v307 = vld [vmem:[%s8 + $0x8] sm:$0xff]
    %v308 = vld [vmem:[%s8 + $0x10] sm:$0xff]
    %v309 = vld [vmem:[%s8 + $0x18] sm:$0xff]
    %v310 = vld [vmem:[%s9] sm:$0x3]
    %v312 = vperm.slane %v310, 0
    %v313 = vperm.slane %v310, 1
    %v320 = vunpack.c.l.b16 %v306
    %v321 = vunpack.c.h.b16 %v306
    %v322 = vunpack.c.l.b16 %v307
    %v323 = vunpack.c.h.b16 %v307
    %v324 = vunpack.c.l.b16 %v308
    %v325 = vunpack.c.h.b16 %v308
    %v326 = vunpack.c.l.b16 %v309
    %v327 = vunpack.c.h.b16 %v309
    %v328 = vpack.c.b16 %v322, %v320
    %v329 = vpack.c.b16 %v323, %v321
    %v330 = vpack.c.b16 %v326, %v324
    %v331 = vpack.c.b16 %v327, %v325
    %v337 = vsel %vm92, %v305, 0
    %339 = vmatpush.bf16.msra.mxu0 0
    %340 = vmatpush.bf16.msra.mxu0 0
    %341 = vmatpush.bf16.msra.mxu0 0
    %342 = vmatpush.bf16.msra.mxu0 0
    %343 = vmatpush.bf16.msra.mxu0 0
    %344 = vmatpush.bf16.msra.mxu0 0
    %345 = vmatpush.bf16.msra.mxu0 %v330
    %346 = vmatpush.bf16.msra.mxu0 %v328
    %347 = vmatmul.bf16.gmra.mxu0 %v337
    %v348 = vpop.f32.mrf.mxu0
    %v349 = vadd.f32 %v312, %v348
    %v350 = vpop.f32.mrf.mxu0
    %v351 = vadd.f32 %v312, %v350
    %352 = vdwg.mxu0
    %353 = vmatpush.bf16.msra.mxu0 0
    %354 = vmatpush.bf16.msra.mxu0 0
    %355 = vmatpush.bf16.msra.mxu0 0
    %356 = vmatpush.bf16.msra.mxu0 0
    %357 = vmatpush.bf16.msra.mxu0 0
    %358 = vmatpush.bf16.msra.mxu0 0
    %359 = vmatpush.bf16.msra.mxu0 %v331
    %360 = vmatpush.bf16.msra.mxu0 %v329
    %361 = vmatmul.bf16.gmra.mxu0 %v337
    %v362 = vpop.f32.mrf.mxu0
    %v363 = vadd.f32 %v313, %v362
    %v364 = vpop.f32.mrf.mxu0
    %v365 = vadd.f32 %v313, %v364
    %366 = vdwg.mxu0
    %v367 = vmax.f32 %v349, 0.0
    %v368 = vmax.f32 %v363, 0.0
    %v369 = vmax.f32 %v351, 0.0
    %v370 = vmax.f32 %v365, 0.0
    %v371 = vpack.c.bf16 %v369, %v367
    %v372 = vpack.c.bf16 %v370, %v368
    %v373 = vld [vmem:[%s10] sm:$0xf]
    %v374 = vld [vmem:[%s10 + $0x4] sm:$0xf]
    %v375 = vld [vmem:[%s10 + $0x8] sm:$0xf]
    %v376 = vld [vmem:[%s10 + $0xc] sm:$0xf]
    %v377 = vld [vmem:[%s10 + $0x10] sm:$0xf]
    %v378 = vld [vmem:[%s10 + $0x14] sm:$0xf]
    %v379 = vld [vmem:[%s10 + $0x18] sm:$0xf]
    %v380 = vld [vmem:[%s10 + $0x1c] sm:$0xf]
    %v381 = vld [vmem:[%s10 + $0x20] sm:$0xf]
    %v382 = vld [vmem:[%s10 + $0x24] sm:$0xf]
    %v383 = vld [vmem:[%s10 + $0x28] sm:$0xf]
    %v384 = vld [vmem:[%s10 + $0x2c] sm:$0xf]
    %v385 = vld [vmem:[%s10 + $0x30] sm:$0xf]
    %v386 = vld [vmem:[%s10 + $0x34] sm:$0xf]
    %v387 = vld [vmem:[%s10 + $0x38] sm:$0xf]
    %v388 = vld [vmem:[%s10 + $0x3c] sm:$0xf]
    %v389 = vld [vmem:[%s10 + $0x40] sm:$0xf]
    %v390 = vld [vmem:[%s10 + $0x44] sm:$0xf]
    %v391 = vld [vmem:[%s10 + $0x48] sm:$0xf]
    %v392 = vld [vmem:[%s10 + $0x4c] sm:$0xf]
    %v393 = vld [vmem:[%s10 + $0x50] sm:$0xf]
    %v394 = vld [vmem:[%s10 + $0x54] sm:$0xf]
    %v395 = vld [vmem:[%s10 + $0x58] sm:$0xf]
    %v396 = vld [vmem:[%s10 + $0x5c] sm:$0xf]
    %v397 = vld [vmem:[%s10 + $0x60] sm:$0xf]
    %v398 = vld [vmem:[%s10 + $0x64] sm:$0xf]
    %v399 = vld [vmem:[%s10 + $0x68] sm:$0xf]
    %v400 = vld [vmem:[%s10 + $0x6c] sm:$0xf]
    %v401 = vld [vmem:[%s10 + $0x70] sm:$0xf]
    %v402 = vld [vmem:[%s10 + $0x74] sm:$0xf]
    %v403 = vld [vmem:[%s10 + $0x78] sm:$0xf]
    %v404 = vld [vmem:[%s10 + $0x7c] sm:$0xf]
    %v405 = vld [vmem:[%s11] sm:$0x1]
    %v407 = vperm.slane %v405, 0
    %v441 = vunpack.c.l.b16 %v373
    %v442 = vunpack.c.l.b16 %v374
    %v443 = vunpack.c.l.b16 %v375
    %v444 = vunpack.c.l.b16 %v376
    %v445 = vunpack.c.l.b16 %v377
    %v446 = vunpack.c.l.b16 %v378
    %v447 = vunpack.c.l.b16 %v379
    %v448 = vunpack.c.l.b16 %v380
    %v449 = vunpack.c.l.b16 %v381
    %v450 = vunpack.c.l.b16 %v382
    %v451 = vunpack.c.l.b16 %v383
    %v452 = vunpack.c.l.b16 %v384
    %v453 = vunpack.c.l.b16 %v385
    %v454 = vunpack.c.l.b16 %v386
    %v455 = vunpack.c.l.b16 %v387
    %v456 = vunpack.c.l.b16 %v388
    %v457 = vunpack.c.l.b16 %v389
    %v458 = vunpack.c.l.b16 %v390
    %v459 = vunpack.c.l.b16 %v391
    %v460 = vunpack.c.l.b16 %v392
    %v461 = vunpack.c.l.b16 %v393
    %v462 = vunpack.c.l.b16 %v394
    %v463 = vunpack.c.l.b16 %v395
    %v464 = vunpack.c.l.b16 %v396
    %v465 = vunpack.c.l.b16 %v397
    %v466 = vunpack.c.l.b16 %v398
    %v467 = vunpack.c.l.b16 %v399
    %v468 = vunpack.c.l.b16 %v400
    %v469 = vunpack.c.l.b16 %v401
    %v470 = vunpack.c.l.b16 %v402
    %v471 = vunpack.c.l.b16 %v403
    %v472 = vunpack.c.l.b16 %v404
    %v473 = vpack.c.b16 %v442, %v441
    %v474 = vpack.c.b16 %v444, %v443
    %v475 = vpack.c.b16 %v446, %v445
    %v476 = vpack.c.b16 %v448, %v447
    %v477 = vpack.c.b16 %v450, %v449
    %v478 = vpack.c.b16 %v452, %v451
    %v479 = vpack.c.b16 %v454, %v453
    %v480 = vpack.c.b16 %v456, %v455
    %v481 = vpack.c.b16 %v458, %v457
    %v482 = vpack.c.b16 %v460, %v459
    %v483 = vpack.c.b16 %v462, %v461
    %v484 = vpack.c.b16 %v464, %v463
    %v485 = vpack.c.b16 %v466, %v465
    %v486 = vpack.c.b16 %v468, %v467
    %v487 = vpack.c.b16 %v470, %v469
    %v488 = vpack.c.b16 %v472, %v471
    %505 = vmatpush.bf16.msra.mxu0 %v480
    %506 = vmatpush.bf16.msra.mxu0 %v479
    %507 = vmatpush.bf16.msra.mxu0 %v478
    %508 = vmatpush.bf16.msra.mxu0 %v477
    %509 = vmatpush.bf16.msra.mxu0 %v476
    %510 = vmatpush.bf16.msra.mxu0 %v475
    %511 = vmatpush.bf16.msra.mxu0 %v474
    %512 = vmatpush.bf16.msra.mxu0 %v473
    %513 = vmatmul.bf16.gmra.mxu0 %v371
    %v514 = vpop.f32.mrf.mxu0
    %v515 = vadd.f32 %v407, %v514
    %v516 = vpop.f32.mrf.mxu0
    %v517 = vadd.f32 %v407, %v516
    %518 = vdwg.mxu0
    %519 = vmatpush.bf16.msra.mxu0 %v488
    %520 = vmatpush.bf16.msra.mxu0 %v487
    %521 = vmatpush.bf16.msra.mxu0 %v486
    %522 = vmatpush.bf16.msra.mxu0 %v485
    %523 = vmatpush.bf16.msra.mxu0 %v484
    %524 = vmatpush.bf16.msra.mxu0 %v483
    %525 = vmatpush.bf16.msra.mxu0 %v482
    %526 = vmatpush.bf16.msra.mxu0 %v481
    %527 = vmatmul.bf16.gmra.mxu0 %v372
    %v528 = vpop.f32.mrf.mxu0
    %v529 = vadd.f32 %v515, %v528
    %v530 = vpop.f32.mrf.mxu0
    %v531 = vadd.f32 %v517, %v530
    %532 = vdwg.mxu0
    %v533 = vadd.f32 %v303, %v529
    %v534 = vadd.f32 %v304, %v531
    %v535 = vld [vmem:[%s14] sm:$0x1]
    %v536 = vld [vmem:[%s15] sm:$0x1]
    %v537 = vsel %vm92, %v533, 0.0
    %538 = vadd.xlane.f32.xlu0 %v537
    %v539 = vpop.xlane.xlu0 %538
    %v540 = vsel %vm92, %v534, 0.0
    %541 = vadd.xlane.f32.xlu0 %v540
    %v542 = vpop.xlane.xlu0 %541
    %v543 = vmul.f32 %v539, %v252
    %v544 = vmul.f32 %v542, %v252
    %v545 = vmul.f32 %v533, %v533
    %v546 = vmul.f32 %v534, %v534
    %v547 = vsel %vm92, %v545, 0.0
    %548 = vadd.xlane.f32.xlu0 %v547
    %v549 = vpop.xlane.xlu0 %548
    %v550 = vsel %vm92, %v546, 0.0
    %551 = vadd.xlane.f32.xlu0 %v550
    %v552 = vpop.xlane.xlu0 %551
    %v553 = vmul.f32 %v549, %v252
    %v554 = vmul.f32 %v552, %v252
    %v555 = vsub.f32 %v533, %v543
    %v556 = vsub.f32 %v534, %v544
    %v557 = vmul.f32 %v543, %v543
    %v558 = vmul.f32 %v544, %v544
    %v559 = vsub.f32 %v553, %v557
    %v560 = vsub.f32 %v554, %v558
    %v561 = vadd.f32 %v559, 1e-05
    %v562 = vadd.f32 %v560, 1e-05
    %v563 = vrsqrt.pop %v561
    %v564 = vmul.f32 %v563, %v561
    %v565 = vmul.f32 %v564, %v563
    %v566 = vmul.f32 0.5, %v565
    %v567 = vsub.f32 1.5, %v566
    %v568 = vmul.f32 %v563, %v567
    %vm569 = vweird.f32 %v561
    %vm570 = vweird.f32 %v563
    %vm571 = vmor %vm569, %vm570
    %v572 = vsel %vm571, %v563, %v568
    %v573 = vrsqrt.pop %v562
    %v574 = vmul.f32 %v573, %v562
    %v575 = vmul.f32 %v574, %v573
    %v576 = vmul.f32 0.5, %v575
    %v577 = vsub.f32 1.5, %v576
    %v578 = vmul.f32 %v573, %v577
    %vm579 = vweird.f32 %v562
    %vm580 = vweird.f32 %v573
    %vm581 = vmor %vm579, %vm580
    %v582 = vsel %vm581, %v573, %v578
    %v583 = vmul.f32 %v555, %v572
    %v584 = vmul.f32 %v556, %v582
    %v586 = vperm.slane %v535, 0
    %v588 = vmul.f32 %v583, %v586
    %v589 = vmul.f32 %v584, %v586
    %v591 = vperm.slane %v536, 0
    %v593 = vadd.f32 %v588, %v591
    %v594 = vadd.f32 %v589, %v591
    %v595 = vpack.c.bf16 %v594, %v593
    %s596 = scalar_lea.vmem %s4, 16
    %v597 = vld [vmem:[%s596] sm:$0xf]
    %v598 = vld [vmem:[%s596 + $0x4] sm:$0xf]
    %v599 = vld [vmem:[%s596 + $0x8] sm:$0xf]
    %v600 = vld [vmem:[%s596 + $0xc] sm:$0xf]
    %s601 = scalar_lea.vmem %s5, 1
    %v602 = vld [vmem:[%s601] sm:$0x1]
    %v604 = vperm.slane %v602, 0
    %v610 = vunpack.c.l.b16 %v597
    %v611 = vunpack.c.l.b16 %v598
    %v612 = vunpack.c.l.b16 %v599
    %v613 = vunpack.c.l.b16 %v600
    %v614 = vpack.c.b16 %v611, %v610
    %v615 = vpack.c.b16 %v613, %v612
    %v619 = vsel %vm92, %v595, 0
    %621 = vmatpush.bf16.msra.mxu0 0
    %622 = vmatpush.bf16.msra.mxu0 0
    %623 = vmatpush.bf16.msra.mxu0 0
    %624 = vmatpush.bf16.msra.mxu0 0
    %625 = vmatpush.bf16.msra.mxu0 0
    %626 = vmatpush.bf16.msra.mxu0 0
    %627 = vmatpush.bf16.msra.mxu0 %v615
    %628 = vmatpush.bf16.msra.mxu0 %v614
    %629 = vmatmul.bf16.gmra.mxu0 %v619
    %v630 = vpop.f32.mrf.mxu0
    %v631 = vadd.f32 %v604, %v630
    %v632 = vpop.f32.mrf.mxu0
    %v633 = vadd.f32 %v604, %v632
    %634 = vdwg.mxu0
    %v635 = vsub.f32 %v631, %v633
    %637 = vrot.lane.b32.xlu0 %v635, 96
    %v638 = vpop.permute.xlu0 %637
    %v640 = vmul.f32 %v631, %v638
    %v641 = vmul.f32 %v633, %v638
    %v642 = vpack.c.bf16 %v641, %v640
    %v644 = vsel %vm92, %v642, 0
    %646 = vmatpush.bf16.msra.mxu0 0
    %647 = vmatpush.bf16.msra.mxu0 0
    %648 = vmatpush.bf16.msra.mxu0 0
    %649 = vmatpush.bf16.msra.mxu0 0
    %650 = vmatpush.bf16.msra.mxu0 0
    %651 = vmatpush.bf16.msra.mxu0 0
    %652 = vmatpush.bf16.msra.mxu0 %v127
    %653 = vmatpush.bf16.msra.mxu0 %v126
    %654 = vmatmul.bf16.gmra.mxu0 %v644
    %v655 = vpop.f32.mrf.mxu0
    %v656 = vadd.f32 0.0, %v655
    %v657 = vpop.f32.mrf.mxu0
    %v658 = vadd.f32 0.0, %v657
    %659 = vdwg.mxu0
    %v660 = vsub.f32 0.0, %v656
    %v661 = vsub.f32 0.0, %v658
    %v662 = vmul.f32 %v660, 1.442695
    %v663 = vpow.pop %v662
    %v664 = vmul.f32 %v661, 1.442695
    %v665 = vpow.pop %v664
    %v666 = vadd.f32 %v663, 1.0
    %v667 = vadd.f32 %v665, 1.0
    %v668 = vrcp.pop %v666
    %v669 = vrcp.pop %v667
    %v670 = vpack.c.bf16 %v669, %v668
    %v672 = vsel %vm158, %v670, 0
    %674 = vmatpush.bf16.msra.mxu0 0
    %675 = vmatpush.bf16.msra.mxu0 0
    %676 = vmatpush.bf16.msra.mxu0 0
    %677 = vmatpush.bf16.msra.mxu0 0
    %678 = vmatpush.bf16.msra.mxu0 0
    %679 = vmatpush.bf16.msra.mxu0 0
    %680 = vmatpush.bf16.msra.mxu0 0
    %681 = vmatpush.bf16.msra.mxu0 %v164
    %682 = vmatmul.bf16.gmra.mxu0 %v672
    %v683 = vpop.f32.mrf.mxu0
    %v684 = vadd.f32 0.0, %v683
    %v685 = vpop.f32.mrf.mxu0
    %v686 = vadd.f32 0.0, %v685
    %687 = vdwg.mxu0
    %688 = vrot.lane.b32.xlu0 %v635, 64
    %v689 = vpop.permute.xlu0 %688
    %v691 = vmul.f32 %v684, %v689
    %v692 = vmul.f32 %v686, %v689
    %695 = vrot.lane.b32.xlu0 %v691, 64
    %v696 = vpop.permute.xlu0 %695
    %697 = vrot.lane.b32.xlu0 %v692, 64
    %v698 = vpop.permute.xlu0 %697
    %v701 = vadd.f32 %v633, %v696
    %v702 = vadd.f32 %v633, %v698
    %v703 = vpack.c.bf16 %v702, %v701
    %s704 = scalar_lea.vmem %s6, 16
    %v705 = vld [vmem:[%s704] sm:$0xf]
    %v706 = vld [vmem:[%s704 + $0x4] sm:$0xf]
    %v707 = vld [vmem:[%s704 + $0x8] sm:$0xf]
    %v708 = vld [vmem:[%s704 + $0xc] sm:$0xf]
    %s709 = scalar_lea.vmem %s7, 1
    %v710 = vld [vmem:[%s709] sm:$0x1]
    %v712 = vperm.slane %v710, 0
    %715 = vrot.lane.b32.xlu0 %v703, 64
    %v716 = vpop.permute.xlu0 %715
    %v721 = vunpack.c.l.b16 %v705
    %v722 = vunpack.c.l.b16 %v706
    %v723 = vunpack.c.l.b16 %v707
    %v724 = vunpack.c.l.b16 %v708
    %v725 = vpack.c.b16 %v722, %v721
    %v726 = vpack.c.b16 %v724, %v723
    %v730 = vsel %vm92, %v716, 0
    %732 = vmatpush.bf16.msra.mxu0 0
    %733 = vmatpush.bf16.msra.mxu0 0
    %734 = vmatpush.bf16.msra.mxu0 0
    %735 = vmatpush.bf16.msra.mxu0 0
    %736 = vmatpush.bf16.msra.mxu0 0
    %737 = vmatpush.bf16.msra.mxu0 0
    %738 = vmatpush.bf16.msra.mxu0 %v726
    %739 = vmatpush.bf16.msra.mxu0 %v725
    %740 = vmatmul.bf16.gmra.mxu0 %v730
    %v741 = vpop.f32.mrf.mxu0
    %v742 = vadd.f32 %v712, %v741
    %v743 = vpop.f32.mrf.mxu0
    %v744 = vadd.f32 %v712, %v743
    %745 = vdwg.mxu0
    %v746 = vadd.f32 %v593, %v742
    %v747 = vadd.f32 %v594, %v744
    %s748 = scalar_lea.vmem %s12, 1
    %v749 = vld [vmem:[%s748] sm:$0x1]
    %s750 = scalar_lea.vmem %s13, 1
    %v751 = vld [vmem:[%s750] sm:$0x1]
    %v752 = vsel %vm92, %v746, 0.0
    %753 = vadd.xlane.f32.xlu0 %v752
    %v754 = vpop.xlane.xlu0 %753
    %v755 = vsel %vm92, %v747, 0.0
    %756 = vadd.xlane.f32.xlu0 %v755
    %v757 = vpop.xlane.xlu0 %756
    %v758 = vmul.f32 %v754, %v252
    %v759 = vmul.f32 %v757, %v252
    %v760 = vmul.f32 %v746, %v746
    %v761 = vmul.f32 %v747, %v747
    %v762 = vsel %vm92, %v760, 0.0
    %763 = vadd.xlane.f32.xlu0 %v762
    %v764 = vpop.xlane.xlu0 %763
    %v765 = vsel %vm92, %v761, 0.0
    %766 = vadd.xlane.f32.xlu0 %v765
    %v767 = vpop.xlane.xlu0 %766
    %v768 = vmul.f32 %v764, %v252
    %v769 = vmul.f32 %v767, %v252
    %v770 = vsub.f32 %v746, %v758
    %v771 = vsub.f32 %v747, %v759
    %v772 = vmul.f32 %v758, %v758
    %v773 = vmul.f32 %v759, %v759
    %v774 = vsub.f32 %v768, %v772
    %v775 = vsub.f32 %v769, %v773
    %v776 = vadd.f32 %v774, 1e-05
    %v777 = vadd.f32 %v775, 1e-05
    %v778 = vrsqrt.pop %v776
    %v779 = vmul.f32 %v778, %v776
    %v780 = vmul.f32 %v779, %v778
    %v781 = vmul.f32 0.5, %v780
    %v782 = vsub.f32 1.5, %v781
    %v783 = vmul.f32 %v778, %v782
    %vm784 = vweird.f32 %v776
    %vm785 = vweird.f32 %v778
    %vm786 = vmor %vm784, %vm785
    %v787 = vsel %vm786, %v778, %v783
    %v788 = vrsqrt.pop %v777
    %v789 = vmul.f32 %v788, %v777
    %v790 = vmul.f32 %v789, %v788
    %v791 = vmul.f32 0.5, %v790
    %v792 = vsub.f32 1.5, %v791
    %v793 = vmul.f32 %v788, %v792
    %vm794 = vweird.f32 %v777
    %vm795 = vweird.f32 %v788
    %vm796 = vmor %vm794, %vm795
    %v797 = vsel %vm796, %v788, %v793
    %v798 = vmul.f32 %v770, %v787
    %v799 = vmul.f32 %v771, %v797
    %v801 = vperm.slane %v749, 0
    %v803 = vmul.f32 %v798, %v801
    %v804 = vmul.f32 %v799, %v801
    %v806 = vperm.slane %v751, 0
    %v808 = vadd.f32 %v803, %v806
    %v809 = vadd.f32 %v804, %v806
    %v810 = vpack.c.bf16 %v809, %v808
    %s811 = scalar_lea.vmem %s8, 32
    %v812 = vld [vmem:[%s811] sm:$0xff]
    %v813 = vld [vmem:[%s811 + $0x8] sm:$0xff]
    %v814 = vld [vmem:[%s811 + $0x10] sm:$0xff]
    %v815 = vld [vmem:[%s811 + $0x18] sm:$0xff]
    %s816 = scalar_lea.vmem %s9, 2
    %v817 = vld [vmem:[%s816] sm:$0x3]
    %v819 = vperm.slane %v817, 0
    %v820 = vperm.slane %v817, 1
    %v827 = vunpack.c.l.b16 %v812
    %v828 = vunpack.c.h.b16 %v812
    %v829 = vunpack.c.l.b16 %v813
    %v830 = vunpack.c.h.b16 %v813
    %v831 = vunpack.c.l.b16 %v814
    %v832 = vunpack.c.h.b16 %v814
    %v833 = vunpack.c.l.b16 %v815
    %v834 = vunpack.c.h.b16 %v815
    %v835 = vpack.c.b16 %v829, %v827
    %v836 = vpack.c.b16 %v830, %v828
    %v837 = vpack.c.b16 %v833, %v831
    %v838 = vpack.c.b16 %v834, %v832
    %v844 = vsel %vm92, %v810, 0
    %846 = vmatpush.bf16.msra.mxu0 0
    %847 = vmatpush.bf16.msra.mxu0 0
    %848 = vmatpush.bf16.msra.mxu0 0
    %849 = vmatpush.bf16.msra.mxu0 0
    %850 = vmatpush.bf16.msra.mxu0 0
    %851 = vmatpush.bf16.msra.mxu0 0
    %852 = vmatpush.bf16.msra.mxu0 %v837
    %853 = vmatpush.bf16.msra.mxu0 %v835
    %854 = vmatmul.bf16.gmra.mxu0 %v844
    %v855 = vpop.f32.mrf.mxu0
    %v856 = vadd.f32 %v819, %v855
    %v857 = vpop.f32.mrf.mxu0
    %v858 = vadd.f32 %v819, %v857
    %859 = vdwg.mxu0
    %860 = vmatpush.bf16.msra.mxu0 0
    %861 = vmatpush.bf16.msra.mxu0 0
    %862 = vmatpush.bf16.msra.mxu0 0
    %863 = vmatpush.bf16.msra.mxu0 0
    %864 = vmatpush.bf16.msra.mxu0 0
    %865 = vmatpush.bf16.msra.mxu0 0
    %866 = vmatpush.bf16.msra.mxu0 %v838
    %867 = vmatpush.bf16.msra.mxu0 %v836
    %868 = vmatmul.bf16.gmra.mxu0 %v844
    %v869 = vpop.f32.mrf.mxu0
    %v870 = vadd.f32 %v820, %v869
    %v871 = vpop.f32.mrf.mxu0
    %v872 = vadd.f32 %v820, %v871
    %873 = vdwg.mxu0
    %v874 = vmax.f32 %v856, 0.0
    %v875 = vmax.f32 %v870, 0.0
    %v876 = vmax.f32 %v858, 0.0
    %v877 = vmax.f32 %v872, 0.0
    %v878 = vpack.c.bf16 %v876, %v874
    %v879 = vpack.c.bf16 %v877, %v875
    %s880 = scalar_lea.vmem %s10, 128
    %v881 = vld [vmem:[%s880] sm:$0xf]
    %v882 = vld [vmem:[%s880 + $0x4] sm:$0xf]
    %v883 = vld [vmem:[%s880 + $0x8] sm:$0xf]
    %v884 = vld [vmem:[%s880 + $0xc] sm:$0xf]
    %v885 = vld [vmem:[%s880 + $0x10] sm:$0xf]
    %v886 = vld [vmem:[%s880 + $0x14] sm:$0xf]
    %v887 = vld [vmem:[%s880 + $0x18] sm:$0xf]
    %v888 = vld [vmem:[%s880 + $0x1c] sm:$0xf]
    %v889 = vld [vmem:[%s880 + $0x20] sm:$0xf]
    %v890 = vld [vmem:[%s880 + $0x24] sm:$0xf]
    %v891 = vld [vmem:[%s880 + $0x28] sm:$0xf]
    %v892 = vld [vmem:[%s880 + $0x2c] sm:$0xf]
    %v893 = vld [vmem:[%s880 + $0x30] sm:$0xf]
    %v894 = vld [vmem:[%s880 + $0x34] sm:$0xf]
    %v895 = vld [vmem:[%s880 + $0x38] sm:$0xf]
    %v896 = vld [vmem:[%s880 + $0x3c] sm:$0xf]
    %v897 = vld [vmem:[%s880 + $0x40] sm:$0xf]
    %v898 = vld [vmem:[%s880 + $0x44] sm:$0xf]
    %v899 = vld [vmem:[%s880 + $0x48] sm:$0xf]
    %v900 = vld [vmem:[%s880 + $0x4c] sm:$0xf]
    %v901 = vld [vmem:[%s880 + $0x50] sm:$0xf]
    %v902 = vld [vmem:[%s880 + $0x54] sm:$0xf]
    %v903 = vld [vmem:[%s880 + $0x58] sm:$0xf]
    %v904 = vld [vmem:[%s880 + $0x5c] sm:$0xf]
    %v905 = vld [vmem:[%s880 + $0x60] sm:$0xf]
    %v906 = vld [vmem:[%s880 + $0x64] sm:$0xf]
    %v907 = vld [vmem:[%s880 + $0x68] sm:$0xf]
    %v908 = vld [vmem:[%s880 + $0x6c] sm:$0xf]
    %v909 = vld [vmem:[%s880 + $0x70] sm:$0xf]
    %v910 = vld [vmem:[%s880 + $0x74] sm:$0xf]
    %v911 = vld [vmem:[%s880 + $0x78] sm:$0xf]
    %v912 = vld [vmem:[%s880 + $0x7c] sm:$0xf]
    %s913 = scalar_lea.vmem %s11, 1
    %v914 = vld [vmem:[%s913] sm:$0x1]
    %v916 = vperm.slane %v914, 0
    %v950 = vunpack.c.l.b16 %v881
    %v951 = vunpack.c.l.b16 %v882
    %v952 = vunpack.c.l.b16 %v883
    %v953 = vunpack.c.l.b16 %v884
    %v954 = vunpack.c.l.b16 %v885
    %v955 = vunpack.c.l.b16 %v886
    %v956 = vunpack.c.l.b16 %v887
    %v957 = vunpack.c.l.b16 %v888
    %v958 = vunpack.c.l.b16 %v889
    %v959 = vunpack.c.l.b16 %v890
    %v960 = vunpack.c.l.b16 %v891
    %v961 = vunpack.c.l.b16 %v892
    %v962 = vunpack.c.l.b16 %v893
    %v963 = vunpack.c.l.b16 %v894
    %v964 = vunpack.c.l.b16 %v895
    %v965 = vunpack.c.l.b16 %v896
    %v966 = vunpack.c.l.b16 %v897
    %v967 = vunpack.c.l.b16 %v898
    %v968 = vunpack.c.l.b16 %v899
    %v969 = vunpack.c.l.b16 %v900
    %v970 = vunpack.c.l.b16 %v901
    %v971 = vunpack.c.l.b16 %v902
    %v972 = vunpack.c.l.b16 %v903
    %v973 = vunpack.c.l.b16 %v904
    %v974 = vunpack.c.l.b16 %v905
    %v975 = vunpack.c.l.b16 %v906
    %v976 = vunpack.c.l.b16 %v907
    %v977 = vunpack.c.l.b16 %v908
    %v978 = vunpack.c.l.b16 %v909
    %v979 = vunpack.c.l.b16 %v910
    %v980 = vunpack.c.l.b16 %v911
    %v981 = vunpack.c.l.b16 %v912
    %v982 = vpack.c.b16 %v951, %v950
    %v983 = vpack.c.b16 %v953, %v952
    %v984 = vpack.c.b16 %v955, %v954
    %v985 = vpack.c.b16 %v957, %v956
    %v986 = vpack.c.b16 %v959, %v958
    %v987 = vpack.c.b16 %v961, %v960
    %v988 = vpack.c.b16 %v963, %v962
    %v989 = vpack.c.b16 %v965, %v964
    %v990 = vpack.c.b16 %v967, %v966
    %v991 = vpack.c.b16 %v969, %v968
    %v992 = vpack.c.b16 %v971, %v970
    %v993 = vpack.c.b16 %v973, %v972
    %v994 = vpack.c.b16 %v975, %v974
    %v995 = vpack.c.b16 %v977, %v976
    %v996 = vpack.c.b16 %v979, %v978
    %v997 = vpack.c.b16 %v981, %v980
    %1014 = vmatpush.bf16.msra.mxu0 %v989
    %1015 = vmatpush.bf16.msra.mxu0 %v988
    %1016 = vmatpush.bf16.msra.mxu0 %v987
    %1017 = vmatpush.bf16.msra.mxu0 %v986
    %1018 = vmatpush.bf16.msra.mxu0 %v985
    %1019 = vmatpush.bf16.msra.mxu0 %v984
    %1020 = vmatpush.bf16.msra.mxu0 %v983
    %1021 = vmatpush.bf16.msra.mxu0 %v982
    %1022 = vmatmul.bf16.gmra.mxu0 %v878
    %v1023 = vpop.f32.mrf.mxu0
    %v1024 = vadd.f32 %v916, %v1023
    %v1025 = vpop.f32.mrf.mxu0
    %v1026 = vadd.f32 %v916, %v1025
    %1027 = vdwg.mxu0
    %1028 = vmatpush.bf16.msra.mxu0 %v997
    %1029 = vmatpush.bf16.msra.mxu0 %v996
    %1030 = vmatpush.bf16.msra.mxu0 %v995
    %1031 = vmatpush.bf16.msra.mxu0 %v994
    %1032 = vmatpush.bf16.msra.mxu0 %v993
    %1033 = vmatpush.bf16.msra.mxu0 %v992
    %1034 = vmatpush.bf16.msra.mxu0 %v991
    %1035 = vmatpush.bf16.msra.mxu0 %v990
    %1036 = vmatmul.bf16.gmra.mxu0 %v879
    %v1037 = vpop.f32.mrf.mxu0
    %v1038 = vadd.f32 %v1024, %v1037
    %v1039 = vpop.f32.mrf.mxu0
    %v1040 = vadd.f32 %v1026, %v1039
    %1041 = vdwg.mxu0
    %v1042 = vadd.f32 %v808, %v1038
    %v1043 = vadd.f32 %v809, %v1040
    %s1044 = scalar_lea.vmem %s14, 1
    %v1045 = vld [vmem:[%s1044] sm:$0x1]
    %s1046 = scalar_lea.vmem %s15, 1
    %v1047 = vld [vmem:[%s1046] sm:$0x1]
    %v1048 = vsel %vm92, %v1042, 0.0
    %1049 = vadd.xlane.f32.xlu0 %v1048
    %v1050 = vpop.xlane.xlu0 %1049
    %v1051 = vsel %vm92, %v1043, 0.0
    %1052 = vadd.xlane.f32.xlu0 %v1051
    %v1053 = vpop.xlane.xlu0 %1052
    %v1054 = vmul.f32 %v1050, %v252
    %v1055 = vmul.f32 %v1053, %v252
    %v1056 = vmul.f32 %v1042, %v1042
    %v1057 = vmul.f32 %v1043, %v1043
    %v1058 = vsel %vm92, %v1056, 0.0
    %1059 = vadd.xlane.f32.xlu0 %v1058
    %v1060 = vpop.xlane.xlu0 %1059
    %v1061 = vsel %vm92, %v1057, 0.0
    %1062 = vadd.xlane.f32.xlu0 %v1061
    %v1063 = vpop.xlane.xlu0 %1062
    %v1064 = vmul.f32 %v1060, %v252
    %v1065 = vmul.f32 %v1063, %v252
    %v1066 = vsub.f32 %v1042, %v1054
    %v1067 = vsub.f32 %v1043, %v1055
    %v1068 = vmul.f32 %v1054, %v1054
    %v1069 = vmul.f32 %v1055, %v1055
    %v1070 = vsub.f32 %v1064, %v1068
    %v1071 = vsub.f32 %v1065, %v1069
    %v1072 = vadd.f32 %v1070, 1e-05
    %v1073 = vadd.f32 %v1071, 1e-05
    %v1074 = vrsqrt.pop %v1072
    %v1075 = vmul.f32 %v1074, %v1072
    %v1076 = vmul.f32 %v1075, %v1074
    %v1077 = vmul.f32 0.5, %v1076
    %v1078 = vsub.f32 1.5, %v1077
    %v1079 = vmul.f32 %v1074, %v1078
    %vm1080 = vweird.f32 %v1072
    %vm1081 = vweird.f32 %v1074
    %vm1082 = vmor %vm1080, %vm1081
    %v1083 = vsel %vm1082, %v1074, %v1079
    %v1084 = vrsqrt.pop %v1073
    %v1085 = vmul.f32 %v1084, %v1073
    %v1086 = vmul.f32 %v1085, %v1084
    %v1087 = vmul.f32 0.5, %v1086
    %v1088 = vsub.f32 1.5, %v1087
    %v1089 = vmul.f32 %v1084, %v1088
    %vm1090 = vweird.f32 %v1073
    %vm1091 = vweird.f32 %v1084
    %vm1092 = vmor %vm1090, %vm1091
    %v1093 = vsel %vm1092, %v1084, %v1089
    %v1094 = vmul.f32 %v1066, %v1083
    %v1095 = vmul.f32 %v1067, %v1093
    %v1097 = vperm.slane %v1045, 0
    %v1099 = vmul.f32 %v1094, %v1097
    %v1100 = vmul.f32 %v1095, %v1097
    %v1102 = vperm.slane %v1047, 0
    %v1104 = vadd.f32 %v1099, %v1102
    %v1105 = vadd.f32 %v1100, %v1102
    %v1106 = vpack.c.bf16 %v1105, %v1104
    %s1107 = scalar_lea.vmem %s4, 32
    %v1108 = vld [vmem:[%s1107] sm:$0xf]
    %v1109 = vld [vmem:[%s1107 + $0x4] sm:$0xf]
    %v1110 = vld [vmem:[%s1107 + $0x8] sm:$0xf]
    %v1111 = vld [vmem:[%s1107 + $0xc] sm:$0xf]
    %s1112 = scalar_lea.vmem %s5, 2
    %v1113 = vld [vmem:[%s1112] sm:$0x1]
    %v1115 = vperm.slane %v1113, 0
    %v1121 = vunpack.c.l.b16 %v1108
    %v1122 = vunpack.c.l.b16 %v1109
    %v1123 = vunpack.c.l.b16 %v1110
    %v1124 = vunpack.c.l.b16 %v1111
    %v1125 = vpack.c.b16 %v1122, %v1121
    %v1126 = vpack.c.b16 %v1124, %v1123
    %v1130 = vsel %vm92, %v1106, 0
    %1132 = vmatpush.bf16.msra.mxu0 0
    %1133 = vmatpush.bf16.msra.mxu0 0
    %1134 = vmatpush.bf16.msra.mxu0 0
    %1135 = vmatpush.bf16.msra.mxu0 0
    %1136 = vmatpush.bf16.msra.mxu0 0
    %1137 = vmatpush.bf16.msra.mxu0 0
    %1138 = vmatpush.bf16.msra.mxu0 %v1126
    %1139 = vmatpush.bf16.msra.mxu0 %v1125
    %1140 = vmatmul.bf16.gmra.mxu0 %v1130
    %v1141 = vpop.f32.mrf.mxu0
    %v1142 = vadd.f32 %v1115, %v1141
    %v1143 = vpop.f32.mrf.mxu0
    %v1144 = vadd.f32 %v1115, %v1143
    %1145 = vdwg.mxu0
    %v1146 = vsub.f32 %v1142, %v1144
    %1148 = vrot.lane.b32.xlu0 %v1146, 96
    %v1149 = vpop.permute.xlu0 %1148
    %v1151 = vmul.f32 %v1142, %v1149
    %v1152 = vmul.f32 %v1144, %v1149
    %v1153 = vpack.c.bf16 %v1152, %v1151
    %v1155 = vsel %vm92, %v1153, 0
    %1157 = vmatpush.bf16.msra.mxu0 0
    %1158 = vmatpush.bf16.msra.mxu0 0
    %1159 = vmatpush.bf16.msra.mxu0 0
    %1160 = vmatpush.bf16.msra.mxu0 0
    %1161 = vmatpush.bf16.msra.mxu0 0
    %1162 = vmatpush.bf16.msra.mxu0 0
    %1163 = vmatpush.bf16.msra.mxu0 %v127
    %1164 = vmatpush.bf16.msra.mxu0 %v126
    %1165 = vmatmul.bf16.gmra.mxu0 %v1155
    %v1166 = vpop.f32.mrf.mxu0
    %v1167 = vadd.f32 0.0, %v1166
    %v1168 = vpop.f32.mrf.mxu0
    %v1169 = vadd.f32 0.0, %v1168
    %1170 = vdwg.mxu0
    %v1171 = vsub.f32 0.0, %v1167
    %v1172 = vsub.f32 0.0, %v1169
    %v1173 = vmul.f32 %v1171, 1.442695
    %v1174 = vpow.pop %v1173
    %v1175 = vmul.f32 %v1172, 1.442695
    %v1176 = vpow.pop %v1175
    %v1177 = vadd.f32 %v1174, 1.0
    %v1178 = vadd.f32 %v1176, 1.0
    %v1179 = vrcp.pop %v1177
    %v1180 = vrcp.pop %v1178
    %v1181 = vpack.c.bf16 %v1180, %v1179
    %v1183 = vsel %vm158, %v1181, 0
    %1185 = vmatpush.bf16.msra.mxu0 0
    %1186 = vmatpush.bf16.msra.mxu0 0
    %1187 = vmatpush.bf16.msra.mxu0 0
    %1188 = vmatpush.bf16.msra.mxu0 0
    %1189 = vmatpush.bf16.msra.mxu0 0
    %1190 = vmatpush.bf16.msra.mxu0 0
    %1191 = vmatpush.bf16.msra.mxu0 0
    %1192 = vmatpush.bf16.msra.mxu0 %v164
    %1193 = vmatmul.bf16.gmra.mxu0 %v1183
    %v1194 = vpop.f32.mrf.mxu0
    %v1195 = vadd.f32 0.0, %v1194
    %v1196 = vpop.f32.mrf.mxu0
    %v1197 = vadd.f32 0.0, %v1196
    %1198 = vdwg.mxu0
    %1199 = vrot.lane.b32.xlu0 %v1146, 64
    %v1200 = vpop.permute.xlu0 %1199
    %v1202 = vmul.f32 %v1195, %v1200
    %v1203 = vmul.f32 %v1197, %v1200
    %1206 = vrot.lane.b32.xlu0 %v1202, 64
    %v1207 = vpop.permute.xlu0 %1206
    %1208 = vrot.lane.b32.xlu0 %v1203, 64
    %v1209 = vpop.permute.xlu0 %1208
    %v1212 = vadd.f32 %v1144, %v1207
    %v1213 = vadd.f32 %v1144, %v1209
    %v1214 = vpack.c.bf16 %v1213, %v1212
    %s1215 = scalar_lea.vmem %s6, 32
    %v1216 = vld [vmem:[%s1215] sm:$0xf]
    %v1217 = vld [vmem:[%s1215 + $0x4] sm:$0xf]
    %v1218 = vld [vmem:[%s1215 + $0x8] sm:$0xf]
    %v1219 = vld [vmem:[%s1215 + $0xc] sm:$0xf]
    %s1220 = scalar_lea.vmem %s7, 2
    %v1221 = vld [vmem:[%s1220] sm:$0x1]
    %v1223 = vperm.slane %v1221, 0
    %1226 = vrot.lane.b32.xlu0 %v1214, 64
    %v1227 = vpop.permute.xlu0 %1226
    %v1232 = vunpack.c.l.b16 %v1216
    %v1233 = vunpack.c.l.b16 %v1217
    %v1234 = vunpack.c.l.b16 %v1218
    %v1235 = vunpack.c.l.b16 %v1219
    %v1236 = vpack.c.b16 %v1233, %v1232
    %v1237 = vpack.c.b16 %v1235, %v1234
    %v1241 = vsel %vm92, %v1227, 0
    %1243 = vmatpush.bf16.msra.mxu0 0
    %1244 = vmatpush.bf16.msra.mxu0 0
    %1245 = vmatpush.bf16.msra.mxu0 0
    %1246 = vmatpush.bf16.msra.mxu0 0
    %1247 = vmatpush.bf16.msra.mxu0 0
    %1248 = vmatpush.bf16.msra.mxu0 0
    %1249 = vmatpush.bf16.msra.mxu0 %v1237
    %1250 = vmatpush.bf16.msra.mxu0 %v1236
    %1251 = vmatmul.bf16.gmra.mxu0 %v1241
    %v1252 = vpop.f32.mrf.mxu0
    %v1253 = vadd.f32 %v1223, %v1252
    %v1254 = vpop.f32.mrf.mxu0
    %v1255 = vadd.f32 %v1223, %v1254
    %1256 = vdwg.mxu0
    %v1257 = vadd.f32 %v1104, %v1253
    %v1258 = vadd.f32 %v1105, %v1255
    %s1259 = scalar_lea.vmem %s12, 2
    %v1260 = vld [vmem:[%s1259] sm:$0x1]
    %s1261 = scalar_lea.vmem %s13, 2
    %v1262 = vld [vmem:[%s1261] sm:$0x1]
    %v1263 = vsel %vm92, %v1257, 0.0
    %1264 = vadd.xlane.f32.xlu0 %v1263
    %v1265 = vpop.xlane.xlu0 %1264
    %v1266 = vsel %vm92, %v1258, 0.0
    %1267 = vadd.xlane.f32.xlu0 %v1266
    %v1268 = vpop.xlane.xlu0 %1267
    %v1269 = vmul.f32 %v1265, %v252
    %v1270 = vmul.f32 %v1268, %v252
    %v1271 = vmul.f32 %v1257, %v1257
    %v1272 = vmul.f32 %v1258, %v1258
    %v1273 = vsel %vm92, %v1271, 0.0
    %1274 = vadd.xlane.f32.xlu0 %v1273
    %v1275 = vpop.xlane.xlu0 %1274
    %v1276 = vsel %vm92, %v1272, 0.0
    %1277 = vadd.xlane.f32.xlu0 %v1276
    %v1278 = vpop.xlane.xlu0 %1277
    %v1279 = vmul.f32 %v1275, %v252
    %v1280 = vmul.f32 %v1278, %v252
    %v1281 = vsub.f32 %v1257, %v1269
    %v1282 = vsub.f32 %v1258, %v1270
    %v1283 = vmul.f32 %v1269, %v1269
    %v1284 = vmul.f32 %v1270, %v1270
    %v1285 = vsub.f32 %v1279, %v1283
    %v1286 = vsub.f32 %v1280, %v1284
    %v1287 = vadd.f32 %v1285, 1e-05
    %v1288 = vadd.f32 %v1286, 1e-05
    %v1289 = vrsqrt.pop %v1287
    %v1290 = vmul.f32 %v1289, %v1287
    %v1291 = vmul.f32 %v1290, %v1289
    %v1292 = vmul.f32 0.5, %v1291
    %v1293 = vsub.f32 1.5, %v1292
    %v1294 = vmul.f32 %v1289, %v1293
    %vm1295 = vweird.f32 %v1287
    %vm1296 = vweird.f32 %v1289
    %vm1297 = vmor %vm1295, %vm1296
    %v1298 = vsel %vm1297, %v1289, %v1294
    %v1299 = vrsqrt.pop %v1288
    %v1300 = vmul.f32 %v1299, %v1288
    %v1301 = vmul.f32 %v1300, %v1299
    %v1302 = vmul.f32 0.5, %v1301
    %v1303 = vsub.f32 1.5, %v1302
    %v1304 = vmul.f32 %v1299, %v1303
    %vm1305 = vweird.f32 %v1288
    %vm1306 = vweird.f32 %v1299
    %vm1307 = vmor %vm1305, %vm1306
    %v1308 = vsel %vm1307, %v1299, %v1304
    %v1309 = vmul.f32 %v1281, %v1298
    %v1310 = vmul.f32 %v1282, %v1308
    %v1312 = vperm.slane %v1260, 0
    %v1314 = vmul.f32 %v1309, %v1312
    %v1315 = vmul.f32 %v1310, %v1312
    %v1317 = vperm.slane %v1262, 0
    %v1319 = vadd.f32 %v1314, %v1317
    %v1320 = vadd.f32 %v1315, %v1317
    %v1321 = vpack.c.bf16 %v1320, %v1319
    %s1322 = scalar_lea.vmem %s8, 64
    %v1323 = vld [vmem:[%s1322] sm:$0xff]
    %v1324 = vld [vmem:[%s1322 + $0x8] sm:$0xff]
    %v1325 = vld [vmem:[%s1322 + $0x10] sm:$0xff]
    %v1326 = vld [vmem:[%s1322 + $0x18] sm:$0xff]
    %s1327 = scalar_lea.vmem %s9, 4
    %v1328 = vld [vmem:[%s1327] sm:$0x3]
    %v1330 = vperm.slane %v1328, 0
    %v1331 = vperm.slane %v1328, 1
    %v1338 = vunpack.c.l.b16 %v1323
    %v1339 = vunpack.c.h.b16 %v1323
    %v1340 = vunpack.c.l.b16 %v1324
    %v1341 = vunpack.c.h.b16 %v1324
    %v1342 = vunpack.c.l.b16 %v1325
    %v1343 = vunpack.c.h.b16 %v1325
    %v1344 = vunpack.c.l.b16 %v1326
    %v1345 = vunpack.c.h.b16 %v1326
    %v1346 = vpack.c.b16 %v1340, %v1338
    %v1347 = vpack.c.b16 %v1341, %v1339
    %v1348 = vpack.c.b16 %v1344, %v1342
    %v1349 = vpack.c.b16 %v1345, %v1343
    %v1355 = vsel %vm92, %v1321, 0
    %1357 = vmatpush.bf16.msra.mxu0 0
    %1358 = vmatpush.bf16.msra.mxu0 0
    %1359 = vmatpush.bf16.msra.mxu0 0
    %1360 = vmatpush.bf16.msra.mxu0 0
    %1361 = vmatpush.bf16.msra.mxu0 0
    %1362 = vmatpush.bf16.msra.mxu0 0
    %1363 = vmatpush.bf16.msra.mxu0 %v1348
    %1364 = vmatpush.bf16.msra.mxu0 %v1346
    %1365 = vmatmul.bf16.gmra.mxu0 %v1355
    %v1366 = vpop.f32.mrf.mxu0
    %v1367 = vadd.f32 %v1330, %v1366
    %v1368 = vpop.f32.mrf.mxu0
    %v1369 = vadd.f32 %v1330, %v1368
    %1370 = vdwg.mxu0
    %1371 = vmatpush.bf16.msra.mxu0 0
    %1372 = vmatpush.bf16.msra.mxu0 0
    %1373 = vmatpush.bf16.msra.mxu0 0
    %1374 = vmatpush.bf16.msra.mxu0 0
    %1375 = vmatpush.bf16.msra.mxu0 0
    %1376 = vmatpush.bf16.msra.mxu0 0
    %1377 = vmatpush.bf16.msra.mxu0 %v1349
    %1378 = vmatpush.bf16.msra.mxu0 %v1347
    %1379 = vmatmul.bf16.gmra.mxu0 %v1355
    %v1380 = vpop.f32.mrf.mxu0
    %v1381 = vadd.f32 %v1331, %v1380
    %v1382 = vpop.f32.mrf.mxu0
    %v1383 = vadd.f32 %v1331, %v1382
    %1384 = vdwg.mxu0
    %v1385 = vmax.f32 %v1367, 0.0
    %v1386 = vmax.f32 %v1381, 0.0
    %v1387 = vmax.f32 %v1369, 0.0
    %v1388 = vmax.f32 %v1383, 0.0
    %v1389 = vpack.c.bf16 %v1387, %v1385
    %v1390 = vpack.c.bf16 %v1388, %v1386
    %s1391 = scalar_lea.vmem %s10, 256
    %v1392 = vld [vmem:[%s1391] sm:$0xf]
    %v1393 = vld [vmem:[%s1391 + $0x4] sm:$0xf]
    %v1394 = vld [vmem:[%s1391 + $0x8] sm:$0xf]
    %v1395 = vld [vmem:[%s1391 + $0xc] sm:$0xf]
    %v1396 = vld [vmem:[%s1391 + $0x10] sm:$0xf]
    %v1397 = vld [vmem:[%s1391 + $0x14] sm:$0xf]
    %v1398 = vld [vmem:[%s1391 + $0x18] sm:$0xf]
    %v1399 = vld [vmem:[%s1391 + $0x1c] sm:$0xf]
    %v1400 = vld [vmem:[%s1391 + $0x20] sm:$0xf]
    %v1401 = vld [vmem:[%s1391 + $0x24] sm:$0xf]
    %v1402 = vld [vmem:[%s1391 + $0x28] sm:$0xf]
    %v1403 = vld [vmem:[%s1391 + $0x2c] sm:$0xf]
    %v1404 = vld [vmem:[%s1391 + $0x30] sm:$0xf]
    %v1405 = vld [vmem:[%s1391 + $0x34] sm:$0xf]
    %v1406 = vld [vmem:[%s1391 + $0x38] sm:$0xf]
    %v1407 = vld [vmem:[%s1391 + $0x3c] sm:$0xf]
    %v1408 = vld [vmem:[%s1391 + $0x40] sm:$0xf]
    %v1409 = vld [vmem:[%s1391 + $0x44] sm:$0xf]
    %v1410 = vld [vmem:[%s1391 + $0x48] sm:$0xf]
    %v1411 = vld [vmem:[%s1391 + $0x4c] sm:$0xf]
    %v1412 = vld [vmem:[%s1391 + $0x50] sm:$0xf]
    %v1413 = vld [vmem:[%s1391 + $0x54] sm:$0xf]
    %v1414 = vld [vmem:[%s1391 + $0x58] sm:$0xf]
    %v1415 = vld [vmem:[%s1391 + $0x5c] sm:$0xf]
    %v1416 = vld [vmem:[%s1391 + $0x60] sm:$0xf]
    %v1417 = vld [vmem:[%s1391 + $0x64] sm:$0xf]
    %v1418 = vld [vmem:[%s1391 + $0x68] sm:$0xf]
    %v1419 = vld [vmem:[%s1391 + $0x6c] sm:$0xf]
    %v1420 = vld [vmem:[%s1391 + $0x70] sm:$0xf]
    %v1421 = vld [vmem:[%s1391 + $0x74] sm:$0xf]
    %v1422 = vld [vmem:[%s1391 + $0x78] sm:$0xf]
    %v1423 = vld [vmem:[%s1391 + $0x7c] sm:$0xf]
    %s1424 = scalar_lea.vmem %s11, 2
    %v1425 = vld [vmem:[%s1424] sm:$0x1]
    %v1427 = vperm.slane %v1425, 0
    %v1461 = vunpack.c.l.b16 %v1392
    %v1462 = vunpack.c.l.b16 %v1393
    %v1463 = vunpack.c.l.b16 %v1394
    %v1464 = vunpack.c.l.b16 %v1395
    %v1465 = vunpack.c.l.b16 %v1396
    %v1466 = vunpack.c.l.b16 %v1397
    %v1467 = vunpack.c.l.b16 %v1398
    %v1468 = vunpack.c.l.b16 %v1399
    %v1469 = vunpack.c.l.b16 %v1400
    %v1470 = vunpack.c.l.b16 %v1401
    %v1471 = vunpack.c.l.b16 %v1402
    %v1472 = vunpack.c.l.b16 %v1403
    %v1473 = vunpack.c.l.b16 %v1404
    %v1474 = vunpack.c.l.b16 %v1405
    %v1475 = vunpack.c.l.b16 %v1406
    %v1476 = vunpack.c.l.b16 %v1407
    %v1477 = vunpack.c.l.b16 %v1408
    %v1478 = vunpack.c.l.b16 %v1409
    %v1479 = vunpack.c.l.b16 %v1410
    %v1480 = vunpack.c.l.b16 %v1411
    %v1481 = vunpack.c.l.b16 %v1412
    %v1482 = vunpack.c.l.b16 %v1413
    %v1483 = vunpack.c.l.b16 %v1414
    %v1484 = vunpack.c.l.b16 %v1415
    %v1485 = vunpack.c.l.b16 %v1416
    %v1486 = vunpack.c.l.b16 %v1417
    %v1487 = vunpack.c.l.b16 %v1418
    %v1488 = vunpack.c.l.b16 %v1419
    %v1489 = vunpack.c.l.b16 %v1420
    %v1490 = vunpack.c.l.b16 %v1421
    %v1491 = vunpack.c.l.b16 %v1422
    %v1492 = vunpack.c.l.b16 %v1423
    %v1493 = vpack.c.b16 %v1462, %v1461
    %v1494 = vpack.c.b16 %v1464, %v1463
    %v1495 = vpack.c.b16 %v1466, %v1465
    %v1496 = vpack.c.b16 %v1468, %v1467
    %v1497 = vpack.c.b16 %v1470, %v1469
    %v1498 = vpack.c.b16 %v1472, %v1471
    %v1499 = vpack.c.b16 %v1474, %v1473
    %v1500 = vpack.c.b16 %v1476, %v1475
    %v1501 = vpack.c.b16 %v1478, %v1477
    %v1502 = vpack.c.b16 %v1480, %v1479
    %v1503 = vpack.c.b16 %v1482, %v1481
    %v1504 = vpack.c.b16 %v1484, %v1483
    %v1505 = vpack.c.b16 %v1486, %v1485
    %v1506 = vpack.c.b16 %v1488, %v1487
    %v1507 = vpack.c.b16 %v1490, %v1489
    %v1508 = vpack.c.b16 %v1492, %v1491
    %1525 = vmatpush.bf16.msra.mxu0 %v1500
    %1526 = vmatpush.bf16.msra.mxu0 %v1499
    %1527 = vmatpush.bf16.msra.mxu0 %v1498
    %1528 = vmatpush.bf16.msra.mxu0 %v1497
    %1529 = vmatpush.bf16.msra.mxu0 %v1496
    %1530 = vmatpush.bf16.msra.mxu0 %v1495
    %1531 = vmatpush.bf16.msra.mxu0 %v1494
    %1532 = vmatpush.bf16.msra.mxu0 %v1493
    %1533 = vmatmul.bf16.gmra.mxu0 %v1389
    %v1534 = vpop.f32.mrf.mxu0
    %v1535 = vadd.f32 %v1427, %v1534
    %v1536 = vpop.f32.mrf.mxu0
    %v1537 = vadd.f32 %v1427, %v1536
    %1538 = vdwg.mxu0
    %1539 = vmatpush.bf16.msra.mxu0 %v1508
    %1540 = vmatpush.bf16.msra.mxu0 %v1507
    %1541 = vmatpush.bf16.msra.mxu0 %v1506
    %1542 = vmatpush.bf16.msra.mxu0 %v1505
    %1543 = vmatpush.bf16.msra.mxu0 %v1504
    %1544 = vmatpush.bf16.msra.mxu0 %v1503
    %1545 = vmatpush.bf16.msra.mxu0 %v1502
    %1546 = vmatpush.bf16.msra.mxu0 %v1501
    %1547 = vmatmul.bf16.gmra.mxu0 %v1390
    %v1548 = vpop.f32.mrf.mxu0
    %v1549 = vadd.f32 %v1535, %v1548
    %v1550 = vpop.f32.mrf.mxu0
    %v1551 = vadd.f32 %v1537, %v1550
    %1552 = vdwg.mxu0
    %v1553 = vadd.f32 %v1319, %v1549
    %v1554 = vadd.f32 %v1320, %v1551
    %s1555 = scalar_lea.vmem %s14, 2
    %v1556 = vld [vmem:[%s1555] sm:$0x1]
    %s1557 = scalar_lea.vmem %s15, 2
    %v1558 = vld [vmem:[%s1557] sm:$0x1]
    %v1559 = vsel %vm92, %v1553, 0.0
    %1560 = vadd.xlane.f32.xlu0 %v1559
    %v1561 = vpop.xlane.xlu0 %1560
    %v1562 = vsel %vm92, %v1554, 0.0
    %1563 = vadd.xlane.f32.xlu0 %v1562
    %v1564 = vpop.xlane.xlu0 %1563
    %v1565 = vmul.f32 %v1561, %v252
    %v1566 = vmul.f32 %v1564, %v252
    %v1567 = vmul.f32 %v1553, %v1553
    %v1568 = vmul.f32 %v1554, %v1554
    %v1569 = vsel %vm92, %v1567, 0.0
    %1570 = vadd.xlane.f32.xlu0 %v1569
    %v1571 = vpop.xlane.xlu0 %1570
    %v1572 = vsel %vm92, %v1568, 0.0
    %1573 = vadd.xlane.f32.xlu0 %v1572
    %v1574 = vpop.xlane.xlu0 %1573
    %v1575 = vmul.f32 %v1571, %v252
    %v1576 = vmul.f32 %v1574, %v252
    %v1577 = vsub.f32 %v1553, %v1565
    %v1578 = vsub.f32 %v1554, %v1566
    %v1579 = vmul.f32 %v1565, %v1565
    %v1580 = vmul.f32 %v1566, %v1566
    %v1581 = vsub.f32 %v1575, %v1579
    %v1582 = vsub.f32 %v1576, %v1580
    %v1583 = vadd.f32 %v1581, 1e-05
    %v1584 = vadd.f32 %v1582, 1e-05
    %v1585 = vrsqrt.pop %v1583
    %v1586 = vmul.f32 %v1585, %v1583
    %v1587 = vmul.f32 %v1586, %v1585
    %v1588 = vmul.f32 0.5, %v1587
    %v1589 = vsub.f32 1.5, %v1588
    %v1590 = vmul.f32 %v1585, %v1589
    %vm1591 = vweird.f32 %v1583
    %vm1592 = vweird.f32 %v1585
    %vm1593 = vmor %vm1591, %vm1592
    %v1594 = vsel %vm1593, %v1585, %v1590
    %v1595 = vrsqrt.pop %v1584
    %v1596 = vmul.f32 %v1595, %v1584
    %v1597 = vmul.f32 %v1596, %v1595
    %v1598 = vmul.f32 0.5, %v1597
    %v1599 = vsub.f32 1.5, %v1598
    %v1600 = vmul.f32 %v1595, %v1599
    %vm1601 = vweird.f32 %v1584
    %vm1602 = vweird.f32 %v1595
    %vm1603 = vmor %vm1601, %vm1602
    %v1604 = vsel %vm1603, %v1595, %v1600
    %v1605 = vmul.f32 %v1577, %v1594
    %v1606 = vmul.f32 %v1578, %v1604
    %v1608 = vperm.slane %v1556, 0
    %v1610 = vmul.f32 %v1605, %v1608
    %v1611 = vmul.f32 %v1606, %v1608
    %v1613 = vperm.slane %v1558, 0
    %v1615 = vadd.f32 %v1610, %v1613
    %v1616 = vadd.f32 %v1611, %v1613
    %v1617 = vsel %vm92, %v1615, 0.0
    %v1618 = vrot.slane %v1617, 4
    %v1619 = vadd.f32 %v1617, %v1618
    %v1620 = vrot.slane %v1619, 2
    %v1621 = vadd.f32 %v1619, %v1620
    %v1622 = vrot.slane %v1621, 1
    %v1623 = vadd.f32 %v1621, %v1622
    %v1624 = vsel %vm92, %v1616, 0.0
    %v1625 = vrot.slane %v1624, 4
    %v1626 = vadd.f32 %v1624, %v1625
    %v1627 = vrot.slane %v1626, 2
    %v1628 = vadd.f32 %v1626, %v1627
    %v1629 = vrot.slane %v1628, 1
    %v1630 = vadd.f32 %v1628, %v1629
    %v1631 = vrcp.pop 8.0
    %v1632 = vmul.f32 8.0, %v1631
    %v1633 = vsub.f32 1.0, %v1632
    %v1634 = vmul.f32 %v1631, %v1633
    %v1635 = vadd.f32 %v1631, %v1634
    %vm1636 = vweird.f32 %v1631
    %v1637 = vsel %vm1636, %v1631, %v1635
    %v1638 = vmul.f32 %v1623, %v1637
    %v1639 = vmul.f32 %v1630, %v1637
    %v1640 = vpack.c.bf16 %v1638, %v1638
    %v1641 = vpack.c.bf16 %v1639, %v1639
    %v1642 = vld [vmem:[%s16] sm:$0xf]
    %v1643 = vld [vmem:[%s16 + $0x4] sm:$0xf]
    %v1644 = vld [vmem:[%s16 + $0x8] sm:$0xf]
    %v1645 = vld [vmem:[%s16 + $0xc] sm:$0xf]
    %v1646 = vld [vmem:[%s17] sm:$0x1]
    %v1648 = vperm.slane %v1646, 0
    %v1652 = vunpack.c.l.b16 %v1640
    %v1653 = vunpack.c.l.b16 %v1641
    %vm1654 = vcmask 1041409
    %v1655 = vsel %vm1654, %v1653, %v1652
    %v1656 = vpack.c.b16 %v1655, %v1655
    %v1661 = vunpack.c.l.b16 %v1642
    %v1662 = vunpack.c.l.b16 %v1643
    %v1663 = vunpack.c.l.b16 %v1644
    %v1664 = vunpack.c.l.b16 %v1645
    %v1665 = vpack.c.b16 %v1662, %v1661
    %v1666 = vpack.c.b16 %v1664, %v1663
    %v1670 = vsel %vm92, %v1656, 0
    %1672 = vmatpush.bf16.msra.mxu0 0
    %1673 = vmatpush.bf16.msra.mxu0 0
    %1674 = vmatpush.bf16.msra.mxu0 0
    %1675 = vmatpush.bf16.msra.mxu0 0
    %1676 = vmatpush.bf16.msra.mxu0 0
    %1677 = vmatpush.bf16.msra.mxu0 0
    %1678 = vmatpush.bf16.msra.mxu0 %v1666
    %1679 = vmatpush.bf16.msra.mxu0 %v1665
    %1680 = vmatmul.bf16.gmra.mxu0 %v1670
    %v1681 = vpop.f32.mrf.mxu0
    %v1682 = vadd.f32 %v1648, %v1681
    %v1683 = vpop.f32.mrf.mxu0
    %1684 = vdwg.mxu0
    %1685 = vst [vmem:[#allocation2] sm:$0x3] %v1682
    // Predicated region
    $region74: #{tpu_custom_call.1} parent=1 // pred_check
      _
    $region75: #{tpu_custom_call.1} parent=1 // pred_check_branch
      %1687 = sbr.rel (0) target = $region77
    $region76: #{tpu_custom_call.1} parent=1 // pred_region
      %1689 = vsyncadd [#allocation3], 0
      %s1691 = sshll.u32 [#allocation2], 4
      %s1692 = int_to_ptr.vmem [resolvable:$true] %s1691
      %s1693 = sshll.u32 %s18, 4
      %s1694 = int_to_ptr.hbm [resolvable:$true] %s1693
      %1696 = dma.vmem_to_hbm [thread:$0]  %s1692, 32, %s1694, [#allocation3]
    $region77: #{tpu_custom_call.1} parent=1 // pred_fallthru
      _
    // Predicated region
    $region78: #{tpu_custom_call.1} parent=1 // pred_check
      _
    $region79: #{tpu_custom_call.1} parent=1 // pred_check_branch
      %1698 = sbr.rel (0) target = $region81
    $region80: #{tpu_custom_call.1} parent=1 // pred_region
      %1700 = dma.done [#allocation3], 32
    $region81: #{tpu_custom_call.1} parent=1 // pred_fallthru
      _
    %1701 = vsyncpa [#allocation3], 1

</llo_original>
